<compile_context>
chip_gen: v5e
topology: v5e:2x2
jax: 0.10.0
libtpu: 0.0.40
codegen_flags: <defaults>
</compile_context>

<pallas_src>
import functools

import jax
import jax.numpy as jnp
from jax.experimental import pallas as pl
from jax.experimental.pallas import tpu as pltpu


# ----------------------------------------------------------------------------
# Helpers
# ----------------------------------------------------------------------------
def _round_up(x: int, m: int) -> int:
    return ((x + m - 1) // m) * m


def _vmem_budget_bytes() -> int:
    """Per-generation usable VMEM budget (75% of physical, conservative fallback)."""
    cap = 64 * 1024 * 1024  # conservative default = v7x per-core physical VMEM
    try:
        info = pltpu.get_tpu_info()
        cap = getattr(info, "vmem_capacity_bytes", cap) or cap
    except Exception:
        pass
    return int(cap * 0.75)


def _largest_divisor_tile(n_pad: int, cap: int) -> int:
    """Largest multiple of 128 that divides n_pad and is <= cap (>= 128)."""
    best, t = 128, 128
    limit = min(cap, n_pad)
    while t <= limit:
        if n_pad % t == 0:
            best = t
        t += 128
    return best


def _pick_stream_tiles(n_pad: int, d: int, budget: int):
    """Rectangular (TM, TK) G tiles: large TK (big contiguous DMAs), moderate TM."""
    tk = _largest_divisor_tile(n_pad, 2048)
    tm = _largest_divisor_tile(n_pad, 512)

    def need(tm_, tk_):
        g = 2 * tm_ * tk_ * 2              # double-buffered bf16 G tiles
        e_res = 2 * n_pad * d * 2          # resident bf16 E (worst case 2 buffers)
        io = 2 * tm_ * d * (4 + 2 + 4)     # sum_in, e_out, sum_out (double-buffered)
        acc = tm_ * d * 4                  # f32 accumulator scratch
        return g + e_res + io + acc + (1 << 20)

    while need(tm, tk) > budget and tk > 128:
        tk = _largest_divisor_tile(n_pad, tk // 2)
    while need(tm, tk) > budget and tm > 128:
        tm = _largest_divisor_tile(n_pad, tm // 2)
    return tm, tk


# ----------------------------------------------------------------------------
# Fused kernel: all L layers + running mean in a single pallas_call (G resident)
# ----------------------------------------------------------------------------
def _fused_propagate_kernel(g_ref, e0_ref, out_ref, *, n_layers):
    # g_ref : (N, N) bf16 graph, resident in VMEM (fetched from HBM exactly once)
    # e0_ref: (N, D) f32 initial embeddings
    # out_ref:(N, D) f32 mean over layers
    e = e0_ref[...]
    acc = e
    for _ in range(n_layers):  # static, tiny trip count -> unrolled at trace time
        e = jnp.dot(g_ref[...], e.astype(jnp.bfloat16),
                    preferred_element_type=jnp.float32)
        acc = acc + e
    out_ref[...] = acc * (1.0 / float(n_layers + 1))


def _fused_propagate(graph_bf16, e0_f32, n_layers, vmem_limit):
    n = graph_bf16.shape[0]
    d = e0_f32.shape[1]
    cost = pl.CostEstimate(
        flops=2 * n * n * d * n_layers,
        transcendentals=0,
        bytes_accessed=n * n * 2 + n * d * 4 + n * d * 4,  # G once + E0 in + mean out
    )
    return pl.pallas_call(
        functools.partial(_fused_propagate_kernel, n_layers=n_layers),
        out_shape=jax.ShapeDtypeStruct((n, d), jnp.float32),
        in_specs=[
            pl.BlockSpec(memory_space=pltpu.MemorySpace.VMEM),  # G resident
            pl.BlockSpec(memory_space=pltpu.MemorySpace.VMEM),  # E0 resident
        ],
        out_specs=pl.BlockSpec(memory_space=pltpu.MemorySpace.VMEM),
        compiler_params=pltpu.CompilerParams(vmem_limit_bytes=vmem_limit),
        cost_estimate=cost,
    )(graph_bf16, e0_f32)


# ----------------------------------------------------------------------------
# Streamed fallback: one layer per pallas_call, resident E, fused epilogue
# ----------------------------------------------------------------------------
def _streamed_layer_kernel(g_ref, e_ref, sum_ref, e_out_ref, sum_out_ref, acc_ref):
    # g_ref: (TM, TK) bf16 graph tile          e_ref: (N, D) bf16, fully resident
    # sum_ref: (TM, D) f32 running sum (in)    e_out_ref: (TM, D) bf16 E_{l+1}
    # sum_out_ref: (TM, D) f32 new running sum acc_ref: (TM, D) f32 scratch
    k = pl.program_id(1)
    tk = g_ref.shape[1]

    @pl.when(k == 0)
    def _():
        acc_ref[...] = jnp.zeros_like(acc_ref)

    off = pl.multiple_of(k * tk, tk)
    acc_ref[...] += jnp.dot(g_ref[...], e_ref[pl.ds(off, tk), :],
                            preferred_element_type=jnp.float32)

    @pl.when(k == pl.num_programs(1) - 1)
    def _():
        e_out_ref[...] = acc_ref[...].astype(e_out_ref.dtype)   # next layer input (bf16)
        sum_out_ref[...] = sum_ref[...] + acc_ref[...]          # fused running sum (f32)


def _streamed_layer(graph_bf16, e_bf16, sum_f32, tm, tk, vmem_limit):
    n = graph_bf16.shape[0]
    d = e_bf16.shape[1]
    grid = (n // tm, n // tk)
    cost = pl.CostEstimate(
        flops=2 * n * n * d,
        transcendentals=0,
        # G once, E resident once, sum in, bf16 E out, f32 sum out
        bytes_accessed=n * n * 2 + n * d * 2 + n * d * 4 + n * d * 2 + n * d * 4,
    )
    return pl.pallas_call(
        _streamed_layer_kernel,
        out_shape=(
            jax.ShapeDtypeStruct((n, d), jnp.bfloat16),
            jax.ShapeDtypeStruct((n, d), jnp.float32),
        ),
        grid_spec=pltpu.PrefetchScalarGridSpec(
            num_scalar_prefetch=0,
            grid=grid,
            in_specs=[
                pl.BlockSpec((tm, tk), lambda i, k: (i, k)),   # G streamed tiles
                pl.BlockSpec((n, d), lambda i, k: (0, 0)),     # E fully resident
                pl.BlockSpec((tm, d), lambda i, k: (i, 0)),    # running sum rows
            ],
            out_specs=[
                pl.BlockSpec((tm, d), lambda i, k: (i, 0)),
                pl.BlockSpec((tm, d), lambda i, k: (i, 0)),
            ],
            scratch_shapes=[pltpu.VMEM((tm, d), jnp.float32)],
        ),
        compiler_params=pltpu.CompilerParams(
            dimension_semantics=("parallel", "arbitrary"),
            vmem_limit_bytes=vmem_limit,
        ),
        cost_estimate=cost,
    )(graph_bf16, e_bf16, sum_f32)


# ----------------------------------------------------------------------------
# Propagation: light_out = mean(E0, G E0, ..., G^L E0)
# ----------------------------------------------------------------------------
def lightgcn_propagate(graph_bf16, all_emb, n_layers, *, force_streamed=False,
                       tm=None, tk=None):
    n = graph_bf16.shape[0]
    d = all_emb.shape[1]
    budget = _vmem_budget_bytes()
    vmem_limit = budget

    e0_f32 = all_emb.astype(jnp.float32)

    # Fused single-call path: G + E + out resident in VMEM (gen-aware cutoff).
    fused_need = n * n * 2 + 2 * n * d * 4 + n * d * 2 + (2 << 20)
    if not force_streamed and fused_need <= budget:
        return _fused_propagate(graph_bf16, e0_f32, n_layers, vmem_limit)

    # Streamed fallback: G tiled, E resident, fused bf16/f32-sum epilogue.
    if tm is None or tk is None:
        tm, tk = _pick_stream_tiles(n, d, budget)
    sum_f32 = e0_f32
    e_bf16 = e0_f32.astype(jnp.bfloat16)
    for _ in range(n_layers):  # static, tiny trip count
        e_bf16, sum_f32 = _streamed_layer(graph_bf16, e_bf16, sum_f32, tm, tk, vmem_limit)
    return sum_f32 * (1.0 / float(n_layers + 1))


# ----------------------------------------------------------------------------
# Full forward pass (jitted end-to-end)
# ----------------------------------------------------------------------------
@functools.partial(jax.jit,
                   static_argnames=("n_layers", "num_users", "num_valid"))
def lightgcn_forward(graph_bf16, user_emb, item_emb, users, items, *,
                     n_layers, num_users, num_valid):
    n_pad = graph_bf16.shape[0]
    all_emb = jnp.concatenate([user_emb, item_emb], axis=0)
    all_emb = jnp.pad(all_emb, ((0, n_pad - num_valid), (0, 0)))

    light_out = lightgcn_propagate(graph_bf16, all_emb, n_layers)

    users_emb = light_out[users]                 # gather (glue JAX; batch=8)
    items_emb = light_out[num_users + items]
    # Scoring is a trivial elementwise reduce at batch=8; a pallas_call here would
    # be pure launch overhead with a lane-sparse (B,) output.
    gamma = jnp.sum(users_emb * items_emb, axis=1)
    return gamma


# ----------------------------------------------------------------------------
# LightGCN module (parameters + dense synthetic normalized graph) in plain JAX
# ----------------------------------------------------------------------------
class LightGCNPallas:
    def __init__(self, num_users, num_items, latent_dim, n_layers, key):
        self.num_users = num_users
        self.num_items = num_items
        self.num_nodes = num_users + num_items
        self.latent_dim = latent_dim
        self.n_layers = n_layers
        self.n_pad = _round_up(self.num_nodes, 128)

        k_us, k_ut, k_it, k_graph = jax.random.split(key, 4)
        # nn.init.normal_(std=0.1) on all embedding tables.
        self.embedding_user_s = 0.1 * jax.random.normal(
            k_us, (num_users, latent_dim), dtype=jnp.float32)
        self.embedding_user_t = 0.1 * jax.random.normal(
            k_ut, (num_users, latent_dim), dtype=jnp.float32)
        self.embedding_item = 0.1 * jax.random.normal(
            k_it, (num_items, latent_dim), dtype=jnp.float32)

        # Synthetic symmetric-normalized bipartite adjacency D^-1/2 A D^-1/2
        # (stands in for dataset.getSparseGraph(); Graph_s == Graph_t in the ref).
        inter = jax.random.bernoulli(
            k_graph, p=0.1, shape=(num_users, num_items)).astype(jnp.float32)
        A = jnp.zeros((self.num_nodes, self.num_nodes), dtype=jnp.float32)
        A = A.at[:num_users, num_users:].set(inter)
        A = A.at[num_users:, :num_users].set(inter.T)
        deg = jnp.sum(A, axis=1)
        d_inv_sqrt = jnp.where(deg > 0, 1.0 / jnp.sqrt(jnp.maximum(deg, 1e-12)), 0.0)
        graph = A * d_inv_sqrt[:, None] * d_inv_sqrt[None, :]

        # Zero-pad to a tile-aligned size and store in bf16 (G dominates HBM bytes).
        graph_pad = jnp.zeros((self.n_pad, self.n_pad), dtype=jnp.float32)
        graph_pad = graph_pad.at[:self.num_nodes, :self.num_nodes].set(graph)
        self.graph_bf16 = graph_pad.astype(jnp.bfloat16)

    def computer(self):
        all_emb = jnp.concatenate([self.embedding_user_s, self.embedding_item], axis=0)
        all_emb = jnp.pad(all_emb, ((0, self.n_pad - self.num_nodes), (0, 0)))
        light_out = lightgcn_propagate(self.graph_bf16, all_emb, self.n_layers)
        users = light_out[:self.num_users]
        items = light_out[self.num_users:self.num_nodes]
        return users, items

    def forward(self, users, items):
        return lightgcn_forward(
            self.graph_bf16, self.embedding_user_s, self.embedding_item,
            users, items,
            n_layers=self.n_layers, num_users=self.num_users,
            num_valid=self.num_nodes)


if __name__ == "__main__":
    key = jax.random.PRNGKey(0)
    k_model, k_users, k_items = jax.random.split(key, 3)

    NUM_USERS = 192
    NUM_ITEMS = 192
    LATENT_DIM = 32
    N_LAYERS = 3
    BATCH = 8

    model = LightGCNPallas(NUM_USERS, NUM_ITEMS, LATENT_DIM, N_LAYERS, k_model)

    users = jax.random.randint(k_users, (BATCH,), 0, NUM_USERS, dtype=jnp.int32)
    items = jax.random.randint(k_items, (BATCH,), 0, NUM_ITEMS, dtype=jnp.int32)

    # --- fused single-call path (the one forward() uses at this size) ---
    gamma = model.forward(users, items)
    gamma = jax.block_until_ready(gamma)

    # --- pure-JAX reference with identical bf16 input rounding, f32 accumulation ---
    n_valid = NUM_USERS + NUM_ITEMS
    g32 = model.graph_bf16.astype(jnp.float32)[:n_valid, :n_valid]
    all_emb = jnp.concatenate([model.embedding_user_s, model.embedding_item], axis=0)
    embs = [all_emb]
    e = all_emb
    for _ in range(N_LAYERS):
        e = jnp.dot(g32, e.astype(jnp.bfloat16).astype(jnp.float32),
                    precision=jax.lax.Precision.HIGHEST)
        embs.append(e)
    light_ref = jnp.mean(jnp.stack(embs, axis=1), axis=1)
    ref_gamma = jnp.sum(light_ref[users] * light_ref[NUM_USERS + items], axis=1)

    assert gamma.shape == (BATCH,)
    assert jnp.allclose(gamma, ref_gamma, atol=1e-3, rtol=1e-3), (
        f"fused path: max abs err = {jnp.max(jnp.abs(gamma - ref_gamma))}")

    # --- streamed fallback path (forced small tiles) validated too ---
    all_emb_pad = jnp.pad(all_emb, ((0, model.n_pad - n_valid), (0, 0)))
    light_streamed = lightgcn_propagate(model.graph_bf16, all_emb_pad, N_LAYERS,
                                        force_streamed=True, tm=128, tk=128)
    light_streamed = jax.block_until_ready(light_streamed)
    gamma_streamed = jnp.sum(light_streamed[users] * light_streamed[NUM_USERS + items],
                             axis=1)
    assert jnp.allclose(gamma_streamed, ref_gamma, atol=1e-3, rtol=1e-3), (
        f"streamed path: max abs err = {jnp.max(jnp.abs(gamma_streamed - ref_gamma))}")

    print("KERNEL_OK")
</pallas_src>

<mosaic_0001>
module attributes {stable_mosaic.version = 11 : i64} {
  func.func @_fused_propagate_kernel(%arg0: memref<384x384xbf16, #tpu.memory_space<vmem>>, %arg1: memref<384x32xf32, #tpu.memory_space<vmem>>, %arg2: memref<384x32xf32, #tpu.memory_space<vmem>>) attributes {dimension_semantics = [], scalar_prefetch = 0 : i64, scratch_operands = 0 : i64, tpu.core_type = #tpu.core_type<tc>} {
    %c0 = arith.constant 0 : index
    %c0_0 = arith.constant 0 : index
    %0 = vector.load %arg1[%c0, %c0_0] : memref<384x32xf32, #tpu.memory_space<vmem>>, vector<384x32xf32>
    %c0_1 = arith.constant 0 : index
    %c0_2 = arith.constant 0 : index
    %1 = vector.load %arg0[%c0_1, %c0_2] : memref<384x384xbf16, #tpu.memory_space<vmem>>, vector<384x384xbf16>
    %2 = arith.truncf %0 : vector<384x32xf32> to vector<384x32xbf16>
    %cst = arith.constant dense<0.000000e+00> : vector<384x32xf32>
    %3 = tpu.matmul %1, %2, %cst {dimension_numbers = #tpu.dot_dimension_numbers<[1], [0], [0], [1], [0, 0, 1, 1], [], []>} : vector<384x384xbf16>, vector<384x32xbf16>, vector<384x32xf32> -> vector<384x32xf32>
    %4 = arith.addf %0, %3 : vector<384x32xf32>
    %c0_3 = arith.constant 0 : index
    %c0_4 = arith.constant 0 : index
    %5 = vector.load %arg0[%c0_3, %c0_4] : memref<384x384xbf16, #tpu.memory_space<vmem>>, vector<384x384xbf16>
    %6 = arith.truncf %3 : vector<384x32xf32> to vector<384x32xbf16>
    %cst_5 = arith.constant dense<0.000000e+00> : vector<384x32xf32>
    %7 = tpu.matmul %5, %6, %cst_5 {dimension_numbers = #tpu.dot_dimension_numbers<[1], [0], [0], [1], [0, 0, 1, 1], [], []>} : vector<384x384xbf16>, vector<384x32xbf16>, vector<384x32xf32> -> vector<384x32xf32>
    %8 = arith.addf %4, %7 : vector<384x32xf32>
    %c0_6 = arith.constant 0 : index
    %c0_7 = arith.constant 0 : index
    %9 = vector.load %arg0[%c0_6, %c0_7] : memref<384x384xbf16, #tpu.memory_space<vmem>>, vector<384x384xbf16>
    %10 = arith.truncf %7 : vector<384x32xf32> to vector<384x32xbf16>
    %cst_8 = arith.constant dense<0.000000e+00> : vector<384x32xf32>
    %11 = tpu.matmul %9, %10, %cst_8 {dimension_numbers = #tpu.dot_dimension_numbers<[1], [0], [0], [1], [0, 0, 1, 1], [], []>} : vector<384x384xbf16>, vector<384x32xbf16>, vector<384x32xf32> -> vector<384x32xf32>
    %12 = arith.addf %8, %11 : vector<384x32xf32>
    %cst_9 = arith.constant 2.500000e-01 : f32
    %13 = vector.broadcast %cst_9 : f32 to vector<384x32xf32>
    %14 = arith.mulf %12, %13 : vector<384x32xf32>
    %c0_10 = arith.constant 0 : index
    %c0_11 = arith.constant 0 : index
    %15 = vector.load %arg2[%c0_10, %c0_11] : memref<384x32xf32, #tpu.memory_space<vmem>>, vector<384x32xf32>
    tpu.vector_store %arg2[%c0_10, %c0_11], %14 {strides = array<i32>} : memref<384x32xf32, #tpu.memory_space<vmem>>, vector<384x32xf32>,
    return
  }
}

</mosaic_0001>

<llo_original>
// kernel: lightgcn_forward.1
$region0: #{lightgcn_forward.1}
  #allocation0 [shape = 'u32[]', space=smem, size = 0x4, offset = 0x4, fixed_abs, tag = 'smem constant byte address 0x4 - core index']
  #allocation1 [shape = 'u32[72,128]{1,0:T(1,128)}', space=vmem, size = 0x9000, scoped, tag = 'internal scratch']
  %s0 = inlined_call_operand.vmem [shape: bf16[384,384], index: 0, kind: input, shape index: {}]
  %s1 = inlined_call_operand.vmem [shape: f32[384,32], index: 1, kind: input, shape index: {}]
  %s2 = inlined_call_operand.vmem [shape: f32[384,32], index: 2, kind: output, shape index: {}]
  %s3 = sld [smem:[#allocation0]]
  $region18: #{lightgcn_forward.1} parent=0
    _
  %s5 = ssub.s32 1, %s3
  %s6 = scalar_select 0, %s5, %s3
  // Predicated region
  $region2: #{lightgcn_forward.1} parent=0 // pred_check
    _
  $region3: #{lightgcn_forward.1} parent=0 // pred_check_branch
    %8 = sbr.rel (0) target = $region5
  $region4: #{lightgcn_forward.1} parent=0 // pred_region
    _
  $region5: #{lightgcn_forward.1} parent=0 // pred_fallthru
    _
  // Predicated region
  $region6: #{lightgcn_forward.1} parent=0 // pred_check
    _
  $region7: #{lightgcn_forward.1} parent=0 // pred_check_branch
    %10 = sbr.rel (0) target = $region9
  $region8: #{lightgcn_forward.1} parent=0 // pred_region
    _
  $region9: #{lightgcn_forward.1} parent=0 // pred_fallthru
    _
  %v11 = vld [vmem:[%s1] sm:$0xff]
  %v12 = vld [vmem:[%s1 + $0x8] sm:$0xff]
  %v13 = vld [vmem:[%s1 + $0x10] sm:$0xff]
  %v14 = vld [vmem:[%s1 + $0x18] sm:$0xff]
  %v15 = vld [vmem:[%s1 + $0x20] sm:$0xff]
  %v16 = vld [vmem:[%s1 + $0x28] sm:$0xff]
  %v17 = vld [vmem:[%s1 + $0x30] sm:$0xff]
  %v18 = vld [vmem:[%s1 + $0x38] sm:$0xff]
  %v19 = vld [vmem:[%s1 + $0x40] sm:$0xff]
  %v20 = vld [vmem:[%s1 + $0x48] sm:$0xff]
  %v21 = vld [vmem:[%s1 + $0x50] sm:$0xff]
  %v22 = vld [vmem:[%s1 + $0x58] sm:$0xff]
  %v23 = vld [vmem:[%s1 + $0x60] sm:$0xff]
  %v24 = vld [vmem:[%s1 + $0x68] sm:$0xff]
  %v25 = vld [vmem:[%s1 + $0x70] sm:$0xff]
  %v26 = vld [vmem:[%s1 + $0x78] sm:$0xff]
  %v27 = vld [vmem:[%s1 + $0x80] sm:$0xff]
  %v28 = vld [vmem:[%s1 + $0x88] sm:$0xff]
  %v29 = vld [vmem:[%s1 + $0x90] sm:$0xff]
  %v30 = vld [vmem:[%s1 + $0x98] sm:$0xff]
  %v31 = vld [vmem:[%s1 + $0xa0] sm:$0xff]
  %v32 = vld [vmem:[%s1 + $0xa8] sm:$0xff]
  %v33 = vld [vmem:[%s1 + $0xb0] sm:$0xff]
  %v34 = vld [vmem:[%s1 + $0xb8] sm:$0xff]
  %v35 = vld [vmem:[%s1 + $0xc0] sm:$0xff]
  %v36 = vld [vmem:[%s1 + $0xc8] sm:$0xff]
  %v37 = vld [vmem:[%s1 + $0xd0] sm:$0xff]
  %v38 = vld [vmem:[%s1 + $0xd8] sm:$0xff]
  %v39 = vld [vmem:[%s1 + $0xe0] sm:$0xff]
  %v40 = vld [vmem:[%s1 + $0xe8] sm:$0xff]
  %v41 = vld [vmem:[%s1 + $0xf0] sm:$0xff]
  %v42 = vld [vmem:[%s1 + $0xf8] sm:$0xff]
  %v43 = vld [vmem:[%s1 + $0x100] sm:$0xff]
  %v44 = vld [vmem:[%s1 + $0x108] sm:$0xff]
  %v45 = vld [vmem:[%s1 + $0x110] sm:$0xff]
  %v46 = vld [vmem:[%s1 + $0x118] sm:$0xff]
  %v47 = vld [vmem:[%s1 + $0x120] sm:$0xff]
  %v48 = vld [vmem:[%s1 + $0x128] sm:$0xff]
  %v49 = vld [vmem:[%s1 + $0x130] sm:$0xff]
  %v50 = vld [vmem:[%s1 + $0x138] sm:$0xff]
  %v51 = vld [vmem:[%s1 + $0x140] sm:$0xff]
  %v52 = vld [vmem:[%s1 + $0x148] sm:$0xff]
  %v53 = vld [vmem:[%s1 + $0x150] sm:$0xff]
  %v54 = vld [vmem:[%s1 + $0x158] sm:$0xff]
  %v55 = vld [vmem:[%s1 + $0x160] sm:$0xff]
  %v56 = vld [vmem:[%s1 + $0x168] sm:$0xff]
  %v57 = vld [vmem:[%s1 + $0x170] sm:$0xff]
  %v58 = vld [vmem:[%s1 + $0x178] sm:$0xff]
  %v59 = vld [vmem:[%s0] sm:$0xff]
  %v60 = vld [vmem:[%s0 + $0x8] sm:$0xf]
  %v61 = vld [vmem:[%s0 + $0xc] sm:$0xff]
  %v62 = vld [vmem:[%s0 + $0x14] sm:$0xf]
  %v63 = vld [vmem:[%s0 + $0x18] sm:$0xff]
  %v64 = vld [vmem:[%s0 + $0x20] sm:$0xf]
  %v65 = vld [vmem:[%s0 + $0x24] sm:$0xff]
  %v66 = vld [vmem:[%s0 + $0x2c] sm:$0xf]
  %v67 = vld [vmem:[%s0 + $0x30] sm:$0xff]
  %v68 = vld [vmem:[%s0 + $0x38] sm:$0xf]
  %v69 = vld [vmem:[%s0 + $0x3c] sm:$0xff]
  %v70 = vld [vmem:[%s0 + $0x44] sm:$0xf]
  %v71 = vld [vmem:[%s0 + $0x48] sm:$0xff]
  %v72 = vld [vmem:[%s0 + $0x50] sm:$0xf]
  %v73 = vld [vmem:[%s0 + $0x54] sm:$0xff]
  %v74 = vld [vmem:[%s0 + $0x5c] sm:$0xf]
  %v75 = vld [vmem:[%s0 + $0x60] sm:$0xff]
  %v76 = vld [vmem:[%s0 + $0x68] sm:$0xf]
  %v77 = vld [vmem:[%s0 + $0x6c] sm:$0xff]
  %v78 = vld [vmem:[%s0 + $0x74] sm:$0xf]
  %v79 = vld [vmem:[%s0 + $0x78] sm:$0xff]
  %v80 = vld [vmem:[%s0 + $0x80] sm:$0xf]
  %v81 = vld [vmem:[%s0 + $0x84] sm:$0xff]
  %v82 = vld [vmem:[%s0 + $0x8c] sm:$0xf]
  %v83 = vld [vmem:[%s0 + $0x90] sm:$0xff]
  %v84 = vld [vmem:[%s0 + $0x98] sm:$0xf]
  %v85 = vld [vmem:[%s0 + $0x9c] sm:$0xff]
  %v86 = vld [vmem:[%s0 + $0xa4] sm:$0xf]
  %v87 = vld [vmem:[%s0 + $0xa8] sm:$0xff]
  %v88 = vld [vmem:[%s0 + $0xb0] sm:$0xf]
  %v89 = vld [vmem:[%s0 + $0xb4] sm:$0xff]
  %v90 = vld [vmem:[%s0 + $0xbc] sm:$0xf]
  %v91 = vld [vmem:[%s0 + $0xc0] sm:$0xff]
  %v92 = vld [vmem:[%s0 + $0xc8] sm:$0xf]
  %v93 = vld [vmem:[%s0 + $0xcc] sm:$0xff]
  %v94 = vld [vmem:[%s0 + $0xd4] sm:$0xf]
  %v95 = vld [vmem:[%s0 + $0xd8] sm:$0xff]
  %v96 = vld [vmem:[%s0 + $0xe0] sm:$0xf]
  %v97 = vld [vmem:[%s0 + $0xe4] sm:$0xff]
  %v98 = vld [vmem:[%s0 + $0xec] sm:$0xf]
  %v99 = vld [vmem:[%s0 + $0xf0] sm:$0xff]
  %v100 = vld [vmem:[%s0 + $0xf8] sm:$0xf]
  %v101 = vld [vmem:[%s0 + $0xfc] sm:$0xff]
  %v102 = vld [vmem:[%s0 + $0x104] sm:$0xf]
  %v103 = vld [vmem:[%s0 + $0x108] sm:$0xff]
  %v104 = vld [vmem:[%s0 + $0x110] sm:$0xf]
  %v105 = vld [vmem:[%s0 + $0x114] sm:$0xff]
  %v106 = vld [vmem:[%s0 + $0x11c] sm:$0xf]
  %v107 = vld [vmem:[%s0 + $0x120] sm:$0xff]
  %v108 = vld [vmem:[%s0 + $0x128] sm:$0xf]
  %v109 = vld [vmem:[%s0 + $0x12c] sm:$0xff]
  %v110 = vld [vmem:[%s0 + $0x134] sm:$0xf]
  %v111 = vld [vmem:[%s0 + $0x138] sm:$0xff]
  %v112 = vld [vmem:[%s0 + $0x140] sm:$0xf]
  %v113 = vld [vmem:[%s0 + $0x144] sm:$0xff]
  %v114 = vld [vmem:[%s0 + $0x14c] sm:$0xf]
  %v115 = vld [vmem:[%s0 + $0x150] sm:$0xff]
  %v116 = vld [vmem:[%s0 + $0x158] sm:$0xf]
  %v117 = vld [vmem:[%s0 + $0x15c] sm:$0xff]
  %v118 = vld [vmem:[%s0 + $0x164] sm:$0xf]
  %v119 = vld [vmem:[%s0 + $0x168] sm:$0xff]
  %v120 = vld [vmem:[%s0 + $0x170] sm:$0xf]
  %v121 = vld [vmem:[%s0 + $0x174] sm:$0xff]
  %v122 = vld [vmem:[%s0 + $0x17c] sm:$0xf]
  %v123 = vld [vmem:[%s0 + $0x180] sm:$0xff]
  %v124 = vld [vmem:[%s0 + $0x188] sm:$0xf]
  %v125 = vld [vmem:[%s0 + $0x18c] sm:$0xff]
  %v126 = vld [vmem:[%s0 + $0x194] sm:$0xf]
  %v127 = vld [vmem:[%s0 + $0x198] sm:$0xff]
  %v128 = vld [vmem:[%s0 + $0x1a0] sm:$0xf]
  %v129 = vld [vmem:[%s0 + $0x1a4] sm:$0xff]
  %v130 = vld [vmem:[%s0 + $0x1ac] sm:$0xf]
  %v131 = vld [vmem:[%s0 + $0x1b0] sm:$0xff]
  %v132 = vld [vmem:[%s0 + $0x1b8] sm:$0xf]
  %v133 = vld [vmem:[%s0 + $0x1bc] sm:$0xff]
  %v134 = vld [vmem:[%s0 + $0x1c4] sm:$0xf]
  %v135 = vld [vmem:[%s0 + $0x1c8] sm:$0xff]
  %v136 = vld [vmem:[%s0 + $0x1d0] sm:$0xf]
  %v137 = vld [vmem:[%s0 + $0x1d4] sm:$0xff]
  %v138 = vld [vmem:[%s0 + $0x1dc] sm:$0xf]
  %v139 = vld [vmem:[%s0 + $0x1e0] sm:$0xff]
  %v140 = vld [vmem:[%s0 + $0x1e8] sm:$0xf]
  %v141 = vld [vmem:[%s0 + $0x1ec] sm:$0xff]
  %v142 = vld [vmem:[%s0 + $0x1f4] sm:$0xf]
  %v143 = vld [vmem:[%s0 + $0x1f8] sm:$0xff]
  %v144 = vld [vmem:[%s0 + $0x200] sm:$0xf]
  %v145 = vld [vmem:[%s0 + $0x204] sm:$0xff]
  %v146 = vld [vmem:[%s0 + $0x20c] sm:$0xf]
  %v147 = vld [vmem:[%s0 + $0x210] sm:$0xff]
  %v148 = vld [vmem:[%s0 + $0x218] sm:$0xf]
  %v149 = vld [vmem:[%s0 + $0x21c] sm:$0xff]
  %v150 = vld [vmem:[%s0 + $0x224] sm:$0xf]
  %v151 = vld [vmem:[%s0 + $0x228] sm:$0xff]
  %v152 = vld [vmem:[%s0 + $0x230] sm:$0xf]
  %v153 = vld [vmem:[%s0 + $0x234] sm:$0xff]
  %v154 = vld [vmem:[%s0 + $0x23c] sm:$0xf]
  %v155 = vpack.c.bf16 %v12, %v11
  %v156 = vpack.c.bf16 %v14, %v13
  %v157 = vpack.c.bf16 %v16, %v15
  %v158 = vpack.c.bf16 %v18, %v17
  %v159 = vpack.c.bf16 %v20, %v19
  %v160 = vpack.c.bf16 %v22, %v21
  %v161 = vpack.c.bf16 %v24, %v23
  %v162 = vpack.c.bf16 %v26, %v25
  %v163 = vpack.c.bf16 %v28, %v27
  %v164 = vpack.c.bf16 %v30, %v29
  %v165 = vpack.c.bf16 %v32, %v31
  %v166 = vpack.c.bf16 %v34, %v33
  %v167 = vpack.c.bf16 %v36, %v35
  %v168 = vpack.c.bf16 %v38, %v37
  %v169 = vpack.c.bf16 %v40, %v39
  %v170 = vpack.c.bf16 %v42, %v41
  %v171 = vpack.c.bf16 %v44, %v43
  %v172 = vpack.c.bf16 %v46, %v45
  %v173 = vpack.c.bf16 %v48, %v47
  %v174 = vpack.c.bf16 %v50, %v49
  %v175 = vpack.c.bf16 %v52, %v51
  %v176 = vpack.c.bf16 %v54, %v53
  %v177 = vpack.c.bf16 %v56, %v55
  %v178 = vpack.c.bf16 %v58, %v57
  %v275 = vunpack.c.l.b16 %v59
  %v276 = vunpack.c.h.b16 %v59
  %v277 = vunpack.c.l.b16 %v60
  %v278 = vunpack.c.l.b16 %v61
  %v279 = vunpack.c.h.b16 %v61
  %v280 = vunpack.c.l.b16 %v62
  %v281 = vunpack.c.l.b16 %v63
  %v282 = vunpack.c.h.b16 %v63
  %v283 = vunpack.c.l.b16 %v64
  %v284 = vunpack.c.l.b16 %v65
  %v285 = vunpack.c.h.b16 %v65
  %v286 = vunpack.c.l.b16 %v66
  %v287 = vunpack.c.l.b16 %v67
  %v288 = vunpack.c.h.b16 %v67
  %v289 = vunpack.c.l.b16 %v68
  %v290 = vunpack.c.l.b16 %v69
  %v291 = vunpack.c.h.b16 %v69
  %v292 = vunpack.c.l.b16 %v70
  %v293 = vunpack.c.l.b16 %v71
  %v294 = vunpack.c.h.b16 %v71
  %v295 = vunpack.c.l.b16 %v72
  %v296 = vunpack.c.l.b16 %v73
  %v297 = vunpack.c.h.b16 %v73
  %v298 = vunpack.c.l.b16 %v74
  %v299 = vunpack.c.l.b16 %v75
  %v300 = vunpack.c.h.b16 %v75
  %v301 = vunpack.c.l.b16 %v76
  %v302 = vunpack.c.l.b16 %v77
  %v303 = vunpack.c.h.b16 %v77
  %v304 = vunpack.c.l.b16 %v78
  %v305 = vunpack.c.l.b16 %v79
  %v306 = vunpack.c.h.b16 %v79
  %v307 = vunpack.c.l.b16 %v80
  %v308 = vunpack.c.l.b16 %v81
  %v309 = vunpack.c.h.b16 %v81
  %v310 = vunpack.c.l.b16 %v82
  %v311 = vunpack.c.l.b16 %v83
  %v312 = vunpack.c.h.b16 %v83
  %v313 = vunpack.c.l.b16 %v84
  %v314 = vunpack.c.l.b16 %v85
  %v315 = vunpack.c.h.b16 %v85
  %v316 = vunpack.c.l.b16 %v86
  %v317 = vunpack.c.l.b16 %v87
  %v318 = vunpack.c.h.b16 %v87
  %v319 = vunpack.c.l.b16 %v88
  %v320 = vunpack.c.l.b16 %v89
  %v321 = vunpack.c.h.b16 %v89
  %v322 = vunpack.c.l.b16 %v90
  %v323 = vunpack.c.l.b16 %v91
  %v324 = vunpack.c.h.b16 %v91
  %v325 = vunpack.c.l.b16 %v92
  %v326 = vunpack.c.l.b16 %v93
  %v327 = vunpack.c.h.b16 %v93
  %v328 = vunpack.c.l.b16 %v94
  %v329 = vunpack.c.l.b16 %v95
  %v330 = vunpack.c.h.b16 %v95
  %v331 = vunpack.c.l.b16 %v96
  %v332 = vunpack.c.l.b16 %v97
  %v333 = vunpack.c.h.b16 %v97
  %v334 = vunpack.c.l.b16 %v98
  %v335 = vunpack.c.l.b16 %v99
  %v336 = vunpack.c.h.b16 %v99
  %v337 = vunpack.c.l.b16 %v100
  %v338 = vunpack.c.l.b16 %v101
  %v339 = vunpack.c.h.b16 %v101
  %v340 = vunpack.c.l.b16 %v102
  %v341 = vunpack.c.l.b16 %v103
  %v342 = vunpack.c.h.b16 %v103
  %v343 = vunpack.c.l.b16 %v104
  %v344 = vunpack.c.l.b16 %v105
  %v345 = vunpack.c.h.b16 %v105
  %v346 = vunpack.c.l.b16 %v106
  %v347 = vunpack.c.l.b16 %v107
  %v348 = vunpack.c.h.b16 %v107
  %v349 = vunpack.c.l.b16 %v108
  %v350 = vunpack.c.l.b16 %v109
  %v351 = vunpack.c.h.b16 %v109
  %v352 = vunpack.c.l.b16 %v110
  %v353 = vunpack.c.l.b16 %v111
  %v354 = vunpack.c.h.b16 %v111
  %v355 = vunpack.c.l.b16 %v112
  %v356 = vunpack.c.l.b16 %v113
  %v357 = vunpack.c.h.b16 %v113
  %v358 = vunpack.c.l.b16 %v114
  %v359 = vunpack.c.l.b16 %v115
  %v360 = vunpack.c.h.b16 %v115
  %v361 = vunpack.c.l.b16 %v116
  %v362 = vunpack.c.l.b16 %v117
  %v363 = vunpack.c.h.b16 %v117
  %v364 = vunpack.c.l.b16 %v118
  %v365 = vunpack.c.l.b16 %v119
  %v366 = vunpack.c.h.b16 %v119
  %v367 = vunpack.c.l.b16 %v120
  %v368 = vunpack.c.l.b16 %v121
  %v369 = vunpack.c.h.b16 %v121
  %v370 = vunpack.c.l.b16 %v122
  %v371 = vunpack.c.l.b16 %v123
  %v372 = vunpack.c.h.b16 %v123
  %v373 = vunpack.c.l.b16 %v124
  %v374 = vunpack.c.l.b16 %v125
  %v375 = vunpack.c.h.b16 %v125
  %v376 = vunpack.c.l.b16 %v126
  %v377 = vunpack.c.l.b16 %v127
  %v378 = vunpack.c.h.b16 %v127
  %v379 = vunpack.c.l.b16 %v128
  %v380 = vunpack.c.l.b16 %v129
  %v381 = vunpack.c.h.b16 %v129
  %v382 = vunpack.c.l.b16 %v130
  %v383 = vunpack.c.l.b16 %v131
  %v384 = vunpack.c.h.b16 %v131
  %v385 = vunpack.c.l.b16 %v132
  %v386 = vunpack.c.l.b16 %v133
  %v387 = vunpack.c.h.b16 %v133
  %v388 = vunpack.c.l.b16 %v134
  %v389 = vunpack.c.l.b16 %v135
  %v390 = vunpack.c.h.b16 %v135
  %v391 = vunpack.c.l.b16 %v136
  %v392 = vunpack.c.l.b16 %v137
  %v393 = vunpack.c.h.b16 %v137
  %v394 = vunpack.c.l.b16 %v138
  %v395 = vunpack.c.l.b16 %v139
  %v396 = vunpack.c.h.b16 %v139
  %v397 = vunpack.c.l.b16 %v140
  %v398 = vunpack.c.l.b16 %v141
  %v399 = vunpack.c.h.b16 %v141
  %v400 = vunpack.c.l.b16 %v142
  %v401 = vunpack.c.l.b16 %v143
  %v402 = vunpack.c.h.b16 %v143
  %v403 = vunpack.c.l.b16 %v144
  %v404 = vunpack.c.l.b16 %v145
  %v405 = vunpack.c.h.b16 %v145
  %v406 = vunpack.c.l.b16 %v146
  %v407 = vunpack.c.l.b16 %v147
  %v408 = vunpack.c.h.b16 %v147
  %v409 = vunpack.c.l.b16 %v148
  %v410 = vunpack.c.l.b16 %v149
  %v411 = vunpack.c.h.b16 %v149
  %v412 = vunpack.c.l.b16 %v150
  %v413 = vunpack.c.l.b16 %v151
  %v414 = vunpack.c.h.b16 %v151
  %v415 = vunpack.c.l.b16 %v152
  %v416 = vunpack.c.l.b16 %v153
  %v417 = vunpack.c.h.b16 %v153
  %v418 = vunpack.c.l.b16 %v154
  %v419 = vpack.c.b16 %v278, %v275
  %v420 = vpack.c.b16 %v279, %v276
  %v421 = vpack.c.b16 %v280, %v277
  %v422 = vpack.c.b16 %v284, %v281
  %v423 = vpack.c.b16 %v285, %v282
  %v424 = vpack.c.b16 %v286, %v283
  %v425 = vpack.c.b16 %v290, %v287
  %v426 = vpack.c.b16 %v291, %v288
  %v427 = vpack.c.b16 %v292, %v289
  %v428 = vpack.c.b16 %v296, %v293
  %v429 = vpack.c.b16 %v297, %v294
  %v430 = vpack.c.b16 %v298, %v295
  %v431 = vpack.c.b16 %v302, %v299
  %v432 = vpack.c.b16 %v303, %v300
  %v433 = vpack.c.b16 %v304, %v301
  %v434 = vpack.c.b16 %v308, %v305
  %v435 = vpack.c.b16 %v309, %v306
  %v436 = vpack.c.b16 %v310, %v307
  %v437 = vpack.c.b16 %v314, %v311
  %v438 = vpack.c.b16 %v315, %v312
  %v439 = vpack.c.b16 %v316, %v313
  %v440 = vpack.c.b16 %v320, %v317
  %v441 = vpack.c.b16 %v321, %v318
  %v442 = vpack.c.b16 %v322, %v319
  %v443 = vpack.c.b16 %v326, %v323
  %v444 = vpack.c.b16 %v327, %v324
  %v445 = vpack.c.b16 %v328, %v325
  %v446 = vpack.c.b16 %v332, %v329
  %v447 = vpack.c.b16 %v333, %v330
  %v448 = vpack.c.b16 %v334, %v331
  %v449 = vpack.c.b16 %v338, %v335
  %v450 = vpack.c.b16 %v339, %v336
  %v451 = vpack.c.b16 %v340, %v337
  %v452 = vpack.c.b16 %v344, %v341
  %v453 = vpack.c.b16 %v345, %v342
  %v454 = vpack.c.b16 %v346, %v343
  %v455 = vpack.c.b16 %v350, %v347
  %v456 = vpack.c.b16 %v351, %v348
  %v457 = vpack.c.b16 %v352, %v349
  %v458 = vpack.c.b16 %v356, %v353
  %v459 = vpack.c.b16 %v357, %v354
  %v460 = vpack.c.b16 %v358, %v355
  %v461 = vpack.c.b16 %v362, %v359
  %v462 = vpack.c.b16 %v363, %v360
  %v463 = vpack.c.b16 %v364, %v361
  %v464 = vpack.c.b16 %v368, %v365
  %v465 = vpack.c.b16 %v369, %v366
  %v466 = vpack.c.b16 %v370, %v367
  %v467 = vpack.c.b16 %v374, %v371
  %v468 = vpack.c.b16 %v375, %v372
  %v469 = vpack.c.b16 %v376, %v373
  %v470 = vpack.c.b16 %v380, %v377
  %v471 = vpack.c.b16 %v381, %v378
  %v472 = vpack.c.b16 %v382, %v379
  %v473 = vpack.c.b16 %v386, %v383
  %v474 = vpack.c.b16 %v387, %v384
  %v475 = vpack.c.b16 %v388, %v385
  %v476 = vpack.c.b16 %v392, %v389
  %v477 = vpack.c.b16 %v393, %v390
  %v478 = vpack.c.b16 %v394, %v391
  %v479 = vpack.c.b16 %v398, %v395
  %v480 = vpack.c.b16 %v399, %v396
  %v481 = vpack.c.b16 %v400, %v397
  %v482 = vpack.c.b16 %v404, %v401
  %v483 = vpack.c.b16 %v405, %v402
  %v484 = vpack.c.b16 %v406, %v403
  %v485 = vpack.c.b16 %v410, %v407
  %v486 = vpack.c.b16 %v411, %v408
  %v487 = vpack.c.b16 %v412, %v409
  %v488 = vpack.c.b16 %v416, %v413
  %v489 = vpack.c.b16 %v417, %v414
  %v490 = vpack.c.b16 %v418, %v415
  %563 = vmatpush.bf16.msra.mxu0 %v162
  %564 = vmatpush.bf16.msra.mxu0 %v161
  %565 = vmatpush.bf16.msra.mxu0 %v160
  %566 = vmatpush.bf16.msra.mxu0 %v159
  %567 = vmatpush.bf16.msra.mxu0 %v158
  %568 = vmatpush.bf16.msra.mxu0 %v157
  %569 = vmatpush.bf16.msra.mxu0 %v156
  %570 = vmatpush.bf16.msra.mxu0 %v155
  %571 = vmatmul.bf16.gmra.mxu0 %v419
  %v572 = vpop.f32.mrf.mxu0
  %v573 = vadd.f32 0.0, %v572
  %v574 = vpop.f32.mrf.mxu0
  %v575 = vadd.f32 0.0, %v574
  %576 = vmatmul.bf16.gmra.mxu0 %v422
  %v577 = vpop.f32.mrf.mxu0
  %v578 = vadd.f32 0.0, %v577
  %v579 = vpop.f32.mrf.mxu0
  %v580 = vadd.f32 0.0, %v579
  %581 = vmatmul.bf16.gmra.mxu0 %v425
  %v582 = vpop.f32.mrf.mxu0
  %v583 = vadd.f32 0.0, %v582
  %v584 = vpop.f32.mrf.mxu0
  %v585 = vadd.f32 0.0, %v584
  %586 = vmatmul.bf16.gmra.mxu0 %v428
  %v587 = vpop.f32.mrf.mxu0
  %v588 = vadd.f32 0.0, %v587
  %v589 = vpop.f32.mrf.mxu0
  %v590 = vadd.f32 0.0, %v589
  %591 = vmatmul.bf16.gmra.mxu0 %v431
  %v592 = vpop.f32.mrf.mxu0
  %v593 = vadd.f32 0.0, %v592
  %v594 = vpop.f32.mrf.mxu0
  %v595 = vadd.f32 0.0, %v594
  %596 = vmatmul.bf16.gmra.mxu0 %v434
  %v597 = vpop.f32.mrf.mxu0
  %v598 = vadd.f32 0.0, %v597
  %v599 = vpop.f32.mrf.mxu0
  %v600 = vadd.f32 0.0, %v599
  %601 = vmatmul.bf16.gmra.mxu0 %v437
  %v602 = vpop.f32.mrf.mxu0
  %v603 = vadd.f32 0.0, %v602
  %v604 = vpop.f32.mrf.mxu0
  %v605 = vadd.f32 0.0, %v604
  %606 = vmatmul.bf16.gmra.mxu0 %v440
  %v607 = vpop.f32.mrf.mxu0
  %v608 = vadd.f32 0.0, %v607
  %v609 = vpop.f32.mrf.mxu0
  %v610 = vadd.f32 0.0, %v609
  %611 = vmatmul.bf16.gmra.mxu0 %v443
  %v612 = vpop.f32.mrf.mxu0
  %v613 = vadd.f32 0.0, %v612
  %v614 = vpop.f32.mrf.mxu0
  %v615 = vadd.f32 0.0, %v614
  %616 = vmatmul.bf16.gmra.mxu0 %v446
  %v617 = vpop.f32.mrf.mxu0
  %v618 = vadd.f32 0.0, %v617
  %v619 = vpop.f32.mrf.mxu0
  %v620 = vadd.f32 0.0, %v619
  %621 = vmatmul.bf16.gmra.mxu0 %v449
  %v622 = vpop.f32.mrf.mxu0
  %v623 = vadd.f32 0.0, %v622
  %v624 = vpop.f32.mrf.mxu0
  %v625 = vadd.f32 0.0, %v624
  %626 = vmatmul.bf16.gmra.mxu0 %v452
  %v627 = vpop.f32.mrf.mxu0
  %v628 = vadd.f32 0.0, %v627
  %v629 = vpop.f32.mrf.mxu0
  %v630 = vadd.f32 0.0, %v629
  %631 = vmatmul.bf16.gmra.mxu0 %v455
  %v632 = vpop.f32.mrf.mxu0
  %v633 = vadd.f32 0.0, %v632
  %v634 = vpop.f32.mrf.mxu0
  %v635 = vadd.f32 0.0, %v634
  %636 = vmatmul.bf16.gmra.mxu0 %v458
  %v637 = vpop.f32.mrf.mxu0
  %v638 = vadd.f32 0.0, %v637
  %v639 = vpop.f32.mrf.mxu0
  %v640 = vadd.f32 0.0, %v639
  %641 = vmatmul.bf16.gmra.mxu0 %v461
  %v642 = vpop.f32.mrf.mxu0
  %v643 = vadd.f32 0.0, %v642
  %v644 = vpop.f32.mrf.mxu0
  %v645 = vadd.f32 0.0, %v644
  %646 = vmatmul.bf16.gmra.mxu0 %v464
  %v647 = vpop.f32.mrf.mxu0
  %v648 = vadd.f32 0.0, %v647
  %v649 = vpop.f32.mrf.mxu0
  %v650 = vadd.f32 0.0, %v649
  %651 = vmatmul.bf16.gmra.mxu0 %v467
  %v652 = vpop.f32.mrf.mxu0
  %v653 = vadd.f32 0.0, %v652
  %v654 = vpop.f32.mrf.mxu0
  %v655 = vadd.f32 0.0, %v654
  %656 = vmatmul.bf16.gmra.mxu0 %v470
  %v657 = vpop.f32.mrf.mxu0
  %v658 = vadd.f32 0.0, %v657
  %v659 = vpop.f32.mrf.mxu0
  %v660 = vadd.f32 0.0, %v659
  %661 = vmatmul.bf16.gmra.mxu0 %v473
  %v662 = vpop.f32.mrf.mxu0
  %v663 = vadd.f32 0.0, %v662
  %v664 = vpop.f32.mrf.mxu0
  %v665 = vadd.f32 0.0, %v664
  %666 = vmatmul.bf16.gmra.mxu0 %v476
  %v667 = vpop.f32.mrf.mxu0
  %v668 = vadd.f32 0.0, %v667
  %v669 = vpop.f32.mrf.mxu0
  %v670 = vadd.f32 0.0, %v669
  %671 = vmatmul.bf16.gmra.mxu0 %v479
  %v672 = vpop.f32.mrf.mxu0
  %v673 = vadd.f32 0.0, %v672
  %v674 = vpop.f32.mrf.mxu0
  %v675 = vadd.f32 0.0, %v674
  %676 = vmatmul.bf16.gmra.mxu0 %v482
  %v677 = vpop.f32.mrf.mxu0
  %v678 = vadd.f32 0.0, %v677
  %v679 = vpop.f32.mrf.mxu0
  %v680 = vadd.f32 0.0, %v679
  %681 = vmatmul.bf16.gmra.mxu0 %v485
  %v682 = vpop.f32.mrf.mxu0
  %v683 = vadd.f32 0.0, %v682
  %v684 = vpop.f32.mrf.mxu0
  %v685 = vadd.f32 0.0, %v684
  %686 = vmatmul.bf16.gmra.mxu0 %v488
  %v687 = vpop.f32.mrf.mxu0
  %v688 = vadd.f32 0.0, %v687
  %v689 = vpop.f32.mrf.mxu0
  %v690 = vadd.f32 0.0, %v689
  %691 = vdwg.mxu0
  %692 = vmatpush.bf16.msra.mxu0 %v170
  %693 = vmatpush.bf16.msra.mxu0 %v169
  %694 = vmatpush.bf16.msra.mxu0 %v168
  %695 = vmatpush.bf16.msra.mxu0 %v167
  %696 = vmatpush.bf16.msra.mxu0 %v166
  %697 = vmatpush.bf16.msra.mxu0 %v165
  %698 = vmatpush.bf16.msra.mxu0 %v164
  %699 = vmatpush.bf16.msra.mxu0 %v163
  %700 = vmatmul.bf16.gmra.mxu0 %v420
  %v701 = vpop.f32.mrf.mxu0
  %v702 = vadd.f32 %v573, %v701
  %v703 = vpop.f32.mrf.mxu0
  %v704 = vadd.f32 %v575, %v703
  %705 = vmatmul.bf16.gmra.mxu0 %v423
  %v706 = vpop.f32.mrf.mxu0
  %v707 = vadd.f32 %v578, %v706
  %v708 = vpop.f32.mrf.mxu0
  %v709 = vadd.f32 %v580, %v708
  %710 = vmatmul.bf16.gmra.mxu0 %v426
  %v711 = vpop.f32.mrf.mxu0
  %v712 = vadd.f32 %v583, %v711
  %v713 = vpop.f32.mrf.mxu0
  %v714 = vadd.f32 %v585, %v713
  %715 = vmatmul.bf16.gmra.mxu0 %v429
  %v716 = vpop.f32.mrf.mxu0
  %v717 = vadd.f32 %v588, %v716
  %v718 = vpop.f32.mrf.mxu0
  %v719 = vadd.f32 %v590, %v718
  %720 = vmatmul.bf16.gmra.mxu0 %v432
  %v721 = vpop.f32.mrf.mxu0
  %v722 = vadd.f32 %v593, %v721
  %v723 = vpop.f32.mrf.mxu0
  %v724 = vadd.f32 %v595, %v723
  %725 = vmatmul.bf16.gmra.mxu0 %v435
  %v726 = vpop.f32.mrf.mxu0
  %v727 = vadd.f32 %v598, %v726
  %v728 = vpop.f32.mrf.mxu0
  %v729 = vadd.f32 %v600, %v728
  %730 = vmatmul.bf16.gmra.mxu0 %v438
  %v731 = vpop.f32.mrf.mxu0
  %v732 = vadd.f32 %v603, %v731
  %v733 = vpop.f32.mrf.mxu0
  %v734 = vadd.f32 %v605, %v733
  %735 = vmatmul.bf16.gmra.mxu0 %v441
  %v736 = vpop.f32.mrf.mxu0
  %v737 = vadd.f32 %v608, %v736
  %v738 = vpop.f32.mrf.mxu0
  %v739 = vadd.f32 %v610, %v738
  %740 = vmatmul.bf16.gmra.mxu0 %v444
  %v741 = vpop.f32.mrf.mxu0
  %v742 = vadd.f32 %v613, %v741
  %v743 = vpop.f32.mrf.mxu0
  %v744 = vadd.f32 %v615, %v743
  %745 = vmatmul.bf16.gmra.mxu0 %v447
  %v746 = vpop.f32.mrf.mxu0
  %v747 = vadd.f32 %v618, %v746
  %v748 = vpop.f32.mrf.mxu0
  %v749 = vadd.f32 %v620, %v748
  %750 = vmatmul.bf16.gmra.mxu0 %v450
  %v751 = vpop.f32.mrf.mxu0
  %v752 = vadd.f32 %v623, %v751
  %v753 = vpop.f32.mrf.mxu0
  %v754 = vadd.f32 %v625, %v753
  %755 = vmatmul.bf16.gmra.mxu0 %v453
  %v756 = vpop.f32.mrf.mxu0
  %v757 = vadd.f32 %v628, %v756
  %v758 = vpop.f32.mrf.mxu0
  %v759 = vadd.f32 %v630, %v758
  %760 = vmatmul.bf16.gmra.mxu0 %v456
  %v761 = vpop.f32.mrf.mxu0
  %v762 = vadd.f32 %v633, %v761
  %v763 = vpop.f32.mrf.mxu0
  %v764 = vadd.f32 %v635, %v763
  %765 = vmatmul.bf16.gmra.mxu0 %v459
  %v766 = vpop.f32.mrf.mxu0
  %v767 = vadd.f32 %v638, %v766
  %v768 = vpop.f32.mrf.mxu0
  %v769 = vadd.f32 %v640, %v768
  %770 = vmatmul.bf16.gmra.mxu0 %v462
  %v771 = vpop.f32.mrf.mxu0
  %v772 = vadd.f32 %v643, %v771
  %v773 = vpop.f32.mrf.mxu0
  %v774 = vadd.f32 %v645, %v773
  %775 = vmatmul.bf16.gmra.mxu0 %v465
  %v776 = vpop.f32.mrf.mxu0
  %v777 = vadd.f32 %v648, %v776
  %v778 = vpop.f32.mrf.mxu0
  %v779 = vadd.f32 %v650, %v778
  %780 = vmatmul.bf16.gmra.mxu0 %v468
  %v781 = vpop.f32.mrf.mxu0
  %v782 = vadd.f32 %v653, %v781
  %v783 = vpop.f32.mrf.mxu0
  %v784 = vadd.f32 %v655, %v783
  %785 = vmatmul.bf16.gmra.mxu0 %v471
  %v786 = vpop.f32.mrf.mxu0
  %v787 = vadd.f32 %v658, %v786
  %v788 = vpop.f32.mrf.mxu0
  %v789 = vadd.f32 %v660, %v788
  %790 = vmatmul.bf16.gmra.mxu0 %v474
  %v791 = vpop.f32.mrf.mxu0
  %v792 = vadd.f32 %v663, %v791
  %v793 = vpop.f32.mrf.mxu0
  %v794 = vadd.f32 %v665, %v793
  %795 = vmatmul.bf16.gmra.mxu0 %v477
  %v796 = vpop.f32.mrf.mxu0
  %v797 = vadd.f32 %v668, %v796
  %v798 = vpop.f32.mrf.mxu0
  %v799 = vadd.f32 %v670, %v798
  %800 = vmatmul.bf16.gmra.mxu0 %v480
  %v801 = vpop.f32.mrf.mxu0
  %v802 = vadd.f32 %v673, %v801
  %v803 = vpop.f32.mrf.mxu0
  %v804 = vadd.f32 %v675, %v803
  %805 = vmatmul.bf16.gmra.mxu0 %v483
  %v806 = vpop.f32.mrf.mxu0
  %v807 = vadd.f32 %v678, %v806
  %v808 = vpop.f32.mrf.mxu0
  %v809 = vadd.f32 %v680, %v808
  %810 = vmatmul.bf16.gmra.mxu0 %v486
  %v811 = vpop.f32.mrf.mxu0
  %v812 = vadd.f32 %v683, %v811
  %v813 = vpop.f32.mrf.mxu0
  %v814 = vadd.f32 %v685, %v813
  %815 = vmatmul.bf16.gmra.mxu0 %v489
  %v816 = vpop.f32.mrf.mxu0
  %v817 = vadd.f32 %v688, %v816
  %v818 = vpop.f32.mrf.mxu0
  %v819 = vadd.f32 %v690, %v818
  %820 = vdwg.mxu0
  %821 = vmatpush.bf16.msra.mxu0 %v178
  %822 = vmatpush.bf16.msra.mxu0 %v177
  %823 = vmatpush.bf16.msra.mxu0 %v176
  %824 = vmatpush.bf16.msra.mxu0 %v175
  %825 = vmatpush.bf16.msra.mxu0 %v174
  %826 = vmatpush.bf16.msra.mxu0 %v173
  %827 = vmatpush.bf16.msra.mxu0 %v172
  %828 = vmatpush.bf16.msra.mxu0 %v171
  %829 = vmatmul.bf16.gmra.mxu0 %v421
  %v830 = vpop.f32.mrf.mxu0
  %v831 = vadd.f32 %v702, %v830
  %v832 = vpop.f32.mrf.mxu0
  %v833 = vadd.f32 %v704, %v832
  %834 = vmatmul.bf16.gmra.mxu0 %v424
  %v835 = vpop.f32.mrf.mxu0
  %v836 = vadd.f32 %v707, %v835
  %v837 = vpop.f32.mrf.mxu0
  %v838 = vadd.f32 %v709, %v837
  %839 = vmatmul.bf16.gmra.mxu0 %v427
  %v840 = vpop.f32.mrf.mxu0
  %v841 = vadd.f32 %v712, %v840
  %v842 = vpop.f32.mrf.mxu0
  %v843 = vadd.f32 %v714, %v842
  %844 = vmatmul.bf16.gmra.mxu0 %v430
  %v845 = vpop.f32.mrf.mxu0
  %v846 = vadd.f32 %v717, %v845
  %v847 = vpop.f32.mrf.mxu0
  %v848 = vadd.f32 %v719, %v847
  %849 = vmatmul.bf16.gmra.mxu0 %v433
  %v850 = vpop.f32.mrf.mxu0
  %v851 = vadd.f32 %v722, %v850
  %v852 = vpop.f32.mrf.mxu0
  %v853 = vadd.f32 %v724, %v852
  %854 = vmatmul.bf16.gmra.mxu0 %v436
  %v855 = vpop.f32.mrf.mxu0
  %v856 = vadd.f32 %v727, %v855
  %v857 = vpop.f32.mrf.mxu0
  %v858 = vadd.f32 %v729, %v857
  %859 = vmatmul.bf16.gmra.mxu0 %v439
  %v860 = vpop.f32.mrf.mxu0
  %v861 = vadd.f32 %v732, %v860
  %v862 = vpop.f32.mrf.mxu0
  %v863 = vadd.f32 %v734, %v862
  %864 = vmatmul.bf16.gmra.mxu0 %v442
  %v865 = vpop.f32.mrf.mxu0
  %v866 = vadd.f32 %v737, %v865
  %v867 = vpop.f32.mrf.mxu0
  %v868 = vadd.f32 %v739, %v867
  %869 = vmatmul.bf16.gmra.mxu0 %v445
  %v870 = vpop.f32.mrf.mxu0
  %v871 = vadd.f32 %v742, %v870
  %v872 = vpop.f32.mrf.mxu0
  %v873 = vadd.f32 %v744, %v872
  %874 = vmatmul.bf16.gmra.mxu0 %v448
  %v875 = vpop.f32.mrf.mxu0
  %v876 = vadd.f32 %v747, %v875
  %v877 = vpop.f32.mrf.mxu0
  %v878 = vadd.f32 %v749, %v877
  %879 = vmatmul.bf16.gmra.mxu0 %v451
  %v880 = vpop.f32.mrf.mxu0
  %v881 = vadd.f32 %v752, %v880
  %v882 = vpop.f32.mrf.mxu0
  %v883 = vadd.f32 %v754, %v882
  %884 = vmatmul.bf16.gmra.mxu0 %v454
  %v885 = vpop.f32.mrf.mxu0
  %v886 = vadd.f32 %v757, %v885
  %v887 = vpop.f32.mrf.mxu0
  %v888 = vadd.f32 %v759, %v887
  %889 = vmatmul.bf16.gmra.mxu0 %v457
  %v890 = vpop.f32.mrf.mxu0
  %v891 = vadd.f32 %v762, %v890
  %v892 = vpop.f32.mrf.mxu0
  %v893 = vadd.f32 %v764, %v892
  %894 = vmatmul.bf16.gmra.mxu0 %v460
  %v895 = vpop.f32.mrf.mxu0
  %v896 = vadd.f32 %v767, %v895
  %v897 = vpop.f32.mrf.mxu0
  %v898 = vadd.f32 %v769, %v897
  %899 = vmatmul.bf16.gmra.mxu0 %v463
  %v900 = vpop.f32.mrf.mxu0
  %v901 = vadd.f32 %v772, %v900
  %v902 = vpop.f32.mrf.mxu0
  %v903 = vadd.f32 %v774, %v902
  %904 = vmatmul.bf16.gmra.mxu0 %v466
  %v905 = vpop.f32.mrf.mxu0
  %v906 = vadd.f32 %v777, %v905
  %v907 = vpop.f32.mrf.mxu0
  %v908 = vadd.f32 %v779, %v907
  %909 = vmatmul.bf16.gmra.mxu0 %v469
  %v910 = vpop.f32.mrf.mxu0
  %v911 = vadd.f32 %v782, %v910
  %v912 = vpop.f32.mrf.mxu0
  %v913 = vadd.f32 %v784, %v912
  %914 = vmatmul.bf16.gmra.mxu0 %v472
  %v915 = vpop.f32.mrf.mxu0
  %v916 = vadd.f32 %v787, %v915
  %v917 = vpop.f32.mrf.mxu0
  %v918 = vadd.f32 %v789, %v917
  %919 = vmatmul.bf16.gmra.mxu0 %v475
  %v920 = vpop.f32.mrf.mxu0
  %v921 = vadd.f32 %v792, %v920
  %v922 = vpop.f32.mrf.mxu0
  %v923 = vadd.f32 %v794, %v922
  %924 = vmatmul.bf16.gmra.mxu0 %v478
  %v925 = vpop.f32.mrf.mxu0
  %v926 = vadd.f32 %v797, %v925
  %v927 = vpop.f32.mrf.mxu0
  %v928 = vadd.f32 %v799, %v927
  %929 = vmatmul.bf16.gmra.mxu0 %v481
  %v930 = vpop.f32.mrf.mxu0
  %v931 = vadd.f32 %v802, %v930
  %v932 = vpop.f32.mrf.mxu0
  %v933 = vadd.f32 %v804, %v932
  %934 = vmatmul.bf16.gmra.mxu0 %v484
  %v935 = vpop.f32.mrf.mxu0
  %v936 = vadd.f32 %v807, %v935
  %v937 = vpop.f32.mrf.mxu0
  %v938 = vadd.f32 %v809, %v937
  %939 = vmatmul.bf16.gmra.mxu0 %v487
  %v940 = vpop.f32.mrf.mxu0
  %v941 = vadd.f32 %v812, %v940
  %v942 = vpop.f32.mrf.mxu0
  %v943 = vadd.f32 %v814, %v942
  %944 = vmatmul.bf16.gmra.mxu0 %v490
  %v945 = vpop.f32.mrf.mxu0
  %v946 = vadd.f32 %v817, %v945
  %v947 = vpop.f32.mrf.mxu0
  %v948 = vadd.f32 %v819, %v947
  %949 = vdwg.mxu0
  %v950 = vadd.f32 %v11, %v831
  %v951 = vadd.f32 %v12, %v833
  %v952 = vadd.f32 %v13, %v836
  %v953 = vadd.f32 %v14, %v838
  %v954 = vadd.f32 %v15, %v841
  %v955 = vadd.f32 %v16, %v843
  %v956 = vadd.f32 %v17, %v846
  %v957 = vadd.f32 %v18, %v848
  %v958 = vadd.f32 %v19, %v851
  %v959 = vadd.f32 %v20, %v853
  %v960 = vadd.f32 %v21, %v856
  %v961 = vadd.f32 %v22, %v858
  %v962 = vadd.f32 %v23, %v861
  %v963 = vadd.f32 %v24, %v863
  %v964 = vadd.f32 %v25, %v866
  %v965 = vadd.f32 %v26, %v868
  %v966 = vadd.f32 %v27, %v871
  %v967 = vadd.f32 %v28, %v873
  %v968 = vadd.f32 %v29, %v876
  %v969 = vadd.f32 %v30, %v878
  %v970 = vadd.f32 %v31, %v881
  %v971 = vadd.f32 %v32, %v883
  %v972 = vadd.f32 %v33, %v886
  %v973 = vadd.f32 %v34, %v888
  %v974 = vadd.f32 %v35, %v891
  %v975 = vadd.f32 %v36, %v893
  %v976 = vadd.f32 %v37, %v896
  %v977 = vadd.f32 %v38, %v898
  %v978 = vadd.f32 %v39, %v901
  %v979 = vadd.f32 %v40, %v903
  %v980 = vadd.f32 %v41, %v906
  %v981 = vadd.f32 %v42, %v908
  %v982 = vadd.f32 %v43, %v911
  %v983 = vadd.f32 %v44, %v913
  %v984 = vadd.f32 %v45, %v916
  %v985 = vadd.f32 %v46, %v918
  %v986 = vadd.f32 %v47, %v921
  %v987 = vadd.f32 %v48, %v923
  %v988 = vadd.f32 %v49, %v926
  %v989 = vadd.f32 %v50, %v928
  %v990 = vadd.f32 %v51, %v931
  %v991 = vadd.f32 %v52, %v933
  %v992 = vadd.f32 %v53, %v936
  %v993 = vadd.f32 %v54, %v938
  %v994 = vadd.f32 %v55, %v941
  %v995 = vadd.f32 %v56, %v943
  %v996 = vadd.f32 %v57, %v946
  %v997 = vadd.f32 %v58, %v948
  %v998 = vpack.c.bf16 %v833, %v831
  %v999 = vpack.c.bf16 %v838, %v836
  %v1000 = vpack.c.bf16 %v843, %v841
  %v1001 = vpack.c.bf16 %v848, %v846
  %v1002 = vpack.c.bf16 %v853, %v851
  %v1003 = vpack.c.bf16 %v858, %v856
  %v1004 = vpack.c.bf16 %v863, %v861
  %v1005 = vpack.c.bf16 %v868, %v866
  %v1006 = vpack.c.bf16 %v873, %v871
  %v1007 = vpack.c.bf16 %v878, %v876
  %v1008 = vpack.c.bf16 %v883, %v881
  %v1009 = vpack.c.bf16 %v888, %v886
  %v1010 = vpack.c.bf16 %v893, %v891
  %v1011 = vpack.c.bf16 %v898, %v896
  %v1012 = vpack.c.bf16 %v903, %v901
  %v1013 = vpack.c.bf16 %v908, %v906
  %v1014 = vpack.c.bf16 %v913, %v911
  %v1015 = vpack.c.bf16 %v918, %v916
  %v1016 = vpack.c.bf16 %v923, %v921
  %v1017 = vpack.c.bf16 %v928, %v926
  %v1018 = vpack.c.bf16 %v933, %v931
  %v1019 = vpack.c.bf16 %v938, %v936
  %v1020 = vpack.c.bf16 %v943, %v941
  %v1021 = vpack.c.bf16 %v948, %v946
  %1022 = vmatpush.bf16.msra.mxu0 %v1005
  %1023 = vmatpush.bf16.msra.mxu0 %v1004
  %1024 = vmatpush.bf16.msra.mxu0 %v1003
  %1025 = vmatpush.bf16.msra.mxu0 %v1002
  %1026 = vmatpush.bf16.msra.mxu0 %v1001
  %1027 = vmatpush.bf16.msra.mxu0 %v1000
  %1028 = vmatpush.bf16.msra.mxu0 %v999
  %1029 = vmatpush.bf16.msra.mxu0 %v998
  %1030 = vmatmul.bf16.gmra.mxu0 %v419
  %v1031 = vpop.f32.mrf.mxu0
  %v1032 = vadd.f32 0.0, %v1031
  %v1033 = vpop.f32.mrf.mxu0
  %v1034 = vadd.f32 0.0, %v1033
  %1035 = vmatmul.bf16.gmra.mxu0 %v422
  %v1036 = vpop.f32.mrf.mxu0
  %v1037 = vadd.f32 0.0, %v1036
  %v1038 = vpop.f32.mrf.mxu0
  %v1039 = vadd.f32 0.0, %v1038
  %1040 = vmatmul.bf16.gmra.mxu0 %v425
  %v1041 = vpop.f32.mrf.mxu0
  %v1042 = vadd.f32 0.0, %v1041
  %v1043 = vpop.f32.mrf.mxu0
  %v1044 = vadd.f32 0.0, %v1043
  %1045 = vmatmul.bf16.gmra.mxu0 %v428
  %v1046 = vpop.f32.mrf.mxu0
  %v1047 = vadd.f32 0.0, %v1046
  %v1048 = vpop.f32.mrf.mxu0
  %v1049 = vadd.f32 0.0, %v1048
  %1050 = vmatmul.bf16.gmra.mxu0 %v431
  %v1051 = vpop.f32.mrf.mxu0
  %v1052 = vadd.f32 0.0, %v1051
  %v1053 = vpop.f32.mrf.mxu0
  %v1054 = vadd.f32 0.0, %v1053
  %1055 = vmatmul.bf16.gmra.mxu0 %v434
  %v1056 = vpop.f32.mrf.mxu0
  %v1057 = vadd.f32 0.0, %v1056
  %v1058 = vpop.f32.mrf.mxu0
  %v1059 = vadd.f32 0.0, %v1058
  %1060 = vmatmul.bf16.gmra.mxu0 %v437
  %v1061 = vpop.f32.mrf.mxu0
  %v1062 = vadd.f32 0.0, %v1061
  %v1063 = vpop.f32.mrf.mxu0
  %v1064 = vadd.f32 0.0, %v1063
  %1065 = vmatmul.bf16.gmra.mxu0 %v440
  %v1066 = vpop.f32.mrf.mxu0
  %v1067 = vadd.f32 0.0, %v1066
  %v1068 = vpop.f32.mrf.mxu0
  %v1069 = vadd.f32 0.0, %v1068
  %1070 = vmatmul.bf16.gmra.mxu0 %v443
  %v1071 = vpop.f32.mrf.mxu0
  %v1072 = vadd.f32 0.0, %v1071
  %v1073 = vpop.f32.mrf.mxu0
  %v1074 = vadd.f32 0.0, %v1073
  %1075 = vmatmul.bf16.gmra.mxu0 %v446
  %v1076 = vpop.f32.mrf.mxu0
  %v1077 = vadd.f32 0.0, %v1076
  %v1078 = vpop.f32.mrf.mxu0
  %v1079 = vadd.f32 0.0, %v1078
  %1080 = vmatmul.bf16.gmra.mxu0 %v449
  %v1081 = vpop.f32.mrf.mxu0
  %v1082 = vadd.f32 0.0, %v1081
  %v1083 = vpop.f32.mrf.mxu0
  %v1084 = vadd.f32 0.0, %v1083
  %1085 = vmatmul.bf16.gmra.mxu0 %v452
  %v1086 = vpop.f32.mrf.mxu0
  %v1087 = vadd.f32 0.0, %v1086
  %v1088 = vpop.f32.mrf.mxu0
  %v1089 = vadd.f32 0.0, %v1088
  %1090 = vmatmul.bf16.gmra.mxu0 %v455
  %v1091 = vpop.f32.mrf.mxu0
  %v1092 = vadd.f32 0.0, %v1091
  %v1093 = vpop.f32.mrf.mxu0
  %v1094 = vadd.f32 0.0, %v1093
  %1095 = vmatmul.bf16.gmra.mxu0 %v458
  %v1096 = vpop.f32.mrf.mxu0
  %v1097 = vadd.f32 0.0, %v1096
  %v1098 = vpop.f32.mrf.mxu0
  %v1099 = vadd.f32 0.0, %v1098
  %1100 = vmatmul.bf16.gmra.mxu0 %v461
  %v1101 = vpop.f32.mrf.mxu0
  %v1102 = vadd.f32 0.0, %v1101
  %v1103 = vpop.f32.mrf.mxu0
  %v1104 = vadd.f32 0.0, %v1103
  %1105 = vmatmul.bf16.gmra.mxu0 %v464
  %v1106 = vpop.f32.mrf.mxu0
  %v1107 = vadd.f32 0.0, %v1106
  %v1108 = vpop.f32.mrf.mxu0
  %v1109 = vadd.f32 0.0, %v1108
  %1110 = vmatmul.bf16.gmra.mxu0 %v467
  %v1111 = vpop.f32.mrf.mxu0
  %v1112 = vadd.f32 0.0, %v1111
  %v1113 = vpop.f32.mrf.mxu0
  %v1114 = vadd.f32 0.0, %v1113
  %1115 = vmatmul.bf16.gmra.mxu0 %v470
  %v1116 = vpop.f32.mrf.mxu0
  %v1117 = vadd.f32 0.0, %v1116
  %v1118 = vpop.f32.mrf.mxu0
  %v1119 = vadd.f32 0.0, %v1118
  %1120 = vmatmul.bf16.gmra.mxu0 %v473
  %v1121 = vpop.f32.mrf.mxu0
  %v1122 = vadd.f32 0.0, %v1121
  %v1123 = vpop.f32.mrf.mxu0
  %v1124 = vadd.f32 0.0, %v1123
  %1125 = vmatmul.bf16.gmra.mxu0 %v476
  %v1126 = vpop.f32.mrf.mxu0
  %v1127 = vadd.f32 0.0, %v1126
  %v1128 = vpop.f32.mrf.mxu0
  %v1129 = vadd.f32 0.0, %v1128
  %1130 = vmatmul.bf16.gmra.mxu0 %v479
  %v1131 = vpop.f32.mrf.mxu0
  %v1132 = vadd.f32 0.0, %v1131
  %v1133 = vpop.f32.mrf.mxu0
  %v1134 = vadd.f32 0.0, %v1133
  %1135 = vmatmul.bf16.gmra.mxu0 %v482
  %v1136 = vpop.f32.mrf.mxu0
  %v1137 = vadd.f32 0.0, %v1136
  %v1138 = vpop.f32.mrf.mxu0
  %v1139 = vadd.f32 0.0, %v1138
  %1140 = vmatmul.bf16.gmra.mxu0 %v485
  %v1141 = vpop.f32.mrf.mxu0
  %v1142 = vadd.f32 0.0, %v1141
  %v1143 = vpop.f32.mrf.mxu0
  %v1144 = vadd.f32 0.0, %v1143
  %1145 = vmatmul.bf16.gmra.mxu0 %v488
  %v1146 = vpop.f32.mrf.mxu0
  %v1147 = vadd.f32 0.0, %v1146
  %v1148 = vpop.f32.mrf.mxu0
  %v1149 = vadd.f32 0.0, %v1148
  %1150 = vdwg.mxu0
  %1151 = vmatpush.bf16.msra.mxu0 %v1013
  %1152 = vmatpush.bf16.msra.mxu0 %v1012
  %1153 = vmatpush.bf16.msra.mxu0 %v1011
  %1154 = vmatpush.bf16.msra.mxu0 %v1010
  %1155 = vmatpush.bf16.msra.mxu0 %v1009
  %1156 = vmatpush.bf16.msra.mxu0 %v1008
  %1157 = vmatpush.bf16.msra.mxu0 %v1007
  %1158 = vmatpush.bf16.msra.mxu0 %v1006
  %1159 = vmatmul.bf16.gmra.mxu0 %v420
  %v1160 = vpop.f32.mrf.mxu0
  %v1161 = vadd.f32 %v1032, %v1160
  %v1162 = vpop.f32.mrf.mxu0
  %v1163 = vadd.f32 %v1034, %v1162
  %1164 = vmatmul.bf16.gmra.mxu0 %v423
  %v1165 = vpop.f32.mrf.mxu0
  %v1166 = vadd.f32 %v1037, %v1165
  %v1167 = vpop.f32.mrf.mxu0
  %v1168 = vadd.f32 %v1039, %v1167
  %1169 = vmatmul.bf16.gmra.mxu0 %v426
  %v1170 = vpop.f32.mrf.mxu0
  %v1171 = vadd.f32 %v1042, %v1170
  %v1172 = vpop.f32.mrf.mxu0
  %v1173 = vadd.f32 %v1044, %v1172
  %1174 = vmatmul.bf16.gmra.mxu0 %v429
  %v1175 = vpop.f32.mrf.mxu0
  %v1176 = vadd.f32 %v1047, %v1175
  %v1177 = vpop.f32.mrf.mxu0
  %v1178 = vadd.f32 %v1049, %v1177
  %1179 = vmatmul.bf16.gmra.mxu0 %v432
  %v1180 = vpop.f32.mrf.mxu0
  %v1181 = vadd.f32 %v1052, %v1180
  %v1182 = vpop.f32.mrf.mxu0
  %v1183 = vadd.f32 %v1054, %v1182
  %1184 = vmatmul.bf16.gmra.mxu0 %v435
  %v1185 = vpop.f32.mrf.mxu0
  %v1186 = vadd.f32 %v1057, %v1185
  %v1187 = vpop.f32.mrf.mxu0
  %v1188 = vadd.f32 %v1059, %v1187
  %1189 = vmatmul.bf16.gmra.mxu0 %v438
  %v1190 = vpop.f32.mrf.mxu0
  %v1191 = vadd.f32 %v1062, %v1190
  %v1192 = vpop.f32.mrf.mxu0
  %v1193 = vadd.f32 %v1064, %v1192
  %1194 = vmatmul.bf16.gmra.mxu0 %v441
  %v1195 = vpop.f32.mrf.mxu0
  %v1196 = vadd.f32 %v1067, %v1195
  %v1197 = vpop.f32.mrf.mxu0
  %v1198 = vadd.f32 %v1069, %v1197
  %1199 = vmatmul.bf16.gmra.mxu0 %v444
  %v1200 = vpop.f32.mrf.mxu0
  %v1201 = vadd.f32 %v1072, %v1200
  %v1202 = vpop.f32.mrf.mxu0
  %v1203 = vadd.f32 %v1074, %v1202
  %1204 = vmatmul.bf16.gmra.mxu0 %v447
  %v1205 = vpop.f32.mrf.mxu0
  %v1206 = vadd.f32 %v1077, %v1205
  %v1207 = vpop.f32.mrf.mxu0
  %v1208 = vadd.f32 %v1079, %v1207
  %1209 = vmatmul.bf16.gmra.mxu0 %v450
  %v1210 = vpop.f32.mrf.mxu0
  %v1211 = vadd.f32 %v1082, %v1210
  %v1212 = vpop.f32.mrf.mxu0
  %v1213 = vadd.f32 %v1084, %v1212
  %1214 = vmatmul.bf16.gmra.mxu0 %v453
  %v1215 = vpop.f32.mrf.mxu0
  %v1216 = vadd.f32 %v1087, %v1215
  %v1217 = vpop.f32.mrf.mxu0
  %v1218 = vadd.f32 %v1089, %v1217
  %1219 = vmatmul.bf16.gmra.mxu0 %v456
  %v1220 = vpop.f32.mrf.mxu0
  %v1221 = vadd.f32 %v1092, %v1220
  %v1222 = vpop.f32.mrf.mxu0
  %v1223 = vadd.f32 %v1094, %v1222
  %1224 = vmatmul.bf16.gmra.mxu0 %v459
  %v1225 = vpop.f32.mrf.mxu0
  %v1226 = vadd.f32 %v1097, %v1225
  %v1227 = vpop.f32.mrf.mxu0
  %v1228 = vadd.f32 %v1099, %v1227
  %1229 = vmatmul.bf16.gmra.mxu0 %v462
  %v1230 = vpop.f32.mrf.mxu0
  %v1231 = vadd.f32 %v1102, %v1230
  %v1232 = vpop.f32.mrf.mxu0
  %v1233 = vadd.f32 %v1104, %v1232
  %1234 = vmatmul.bf16.gmra.mxu0 %v465
  %v1235 = vpop.f32.mrf.mxu0
  %v1236 = vadd.f32 %v1107, %v1235
  %v1237 = vpop.f32.mrf.mxu0
  %v1238 = vadd.f32 %v1109, %v1237
  %1239 = vmatmul.bf16.gmra.mxu0 %v468
  %v1240 = vpop.f32.mrf.mxu0
  %v1241 = vadd.f32 %v1112, %v1240
  %v1242 = vpop.f32.mrf.mxu0
  %v1243 = vadd.f32 %v1114, %v1242
  %1244 = vmatmul.bf16.gmra.mxu0 %v471
  %v1245 = vpop.f32.mrf.mxu0
  %v1246 = vadd.f32 %v1117, %v1245
  %v1247 = vpop.f32.mrf.mxu0
  %v1248 = vadd.f32 %v1119, %v1247
  %1249 = vmatmul.bf16.gmra.mxu0 %v474
  %v1250 = vpop.f32.mrf.mxu0
  %v1251 = vadd.f32 %v1122, %v1250
  %v1252 = vpop.f32.mrf.mxu0
  %v1253 = vadd.f32 %v1124, %v1252
  %1254 = vmatmul.bf16.gmra.mxu0 %v477
  %v1255 = vpop.f32.mrf.mxu0
  %v1256 = vadd.f32 %v1127, %v1255
  %v1257 = vpop.f32.mrf.mxu0
  %v1258 = vadd.f32 %v1129, %v1257
  %1259 = vmatmul.bf16.gmra.mxu0 %v480
  %v1260 = vpop.f32.mrf.mxu0
  %v1261 = vadd.f32 %v1132, %v1260
  %v1262 = vpop.f32.mrf.mxu0
  %v1263 = vadd.f32 %v1134, %v1262
  %1264 = vmatmul.bf16.gmra.mxu0 %v483
  %v1265 = vpop.f32.mrf.mxu0
  %v1266 = vadd.f32 %v1137, %v1265
  %v1267 = vpop.f32.mrf.mxu0
  %v1268 = vadd.f32 %v1139, %v1267
  %1269 = vmatmul.bf16.gmra.mxu0 %v486
  %v1270 = vpop.f32.mrf.mxu0
  %v1271 = vadd.f32 %v1142, %v1270
  %v1272 = vpop.f32.mrf.mxu0
  %v1273 = vadd.f32 %v1144, %v1272
  %1274 = vmatmul.bf16.gmra.mxu0 %v489
  %v1275 = vpop.f32.mrf.mxu0
  %v1276 = vadd.f32 %v1147, %v1275
  %v1277 = vpop.f32.mrf.mxu0
  %v1278 = vadd.f32 %v1149, %v1277
  %1279 = vdwg.mxu0
  %1280 = vmatpush.bf16.msra.mxu0 %v1021
  %1281 = vmatpush.bf16.msra.mxu0 %v1020
  %1282 = vmatpush.bf16.msra.mxu0 %v1019
  %1283 = vmatpush.bf16.msra.mxu0 %v1018
  %1284 = vmatpush.bf16.msra.mxu0 %v1017
  %1285 = vmatpush.bf16.msra.mxu0 %v1016
  %1286 = vmatpush.bf16.msra.mxu0 %v1015
  %1287 = vmatpush.bf16.msra.mxu0 %v1014
  %1288 = vmatmul.bf16.gmra.mxu0 %v421
  %v1289 = vpop.f32.mrf.mxu0
  %v1290 = vadd.f32 %v1161, %v1289
  %v1291 = vpop.f32.mrf.mxu0
  %v1292 = vadd.f32 %v1163, %v1291
  %1293 = vmatmul.bf16.gmra.mxu0 %v424
  %v1294 = vpop.f32.mrf.mxu0
  %v1295 = vadd.f32 %v1166, %v1294
  %v1296 = vpop.f32.mrf.mxu0
  %v1297 = vadd.f32 %v1168, %v1296
  %1298 = vmatmul.bf16.gmra.mxu0 %v427
  %v1299 = vpop.f32.mrf.mxu0
  %v1300 = vadd.f32 %v1171, %v1299
  %v1301 = vpop.f32.mrf.mxu0
  %v1302 = vadd.f32 %v1173, %v1301
  %1303 = vmatmul.bf16.gmra.mxu0 %v430
  %v1304 = vpop.f32.mrf.mxu0
  %v1305 = vadd.f32 %v1176, %v1304
  %v1306 = vpop.f32.mrf.mxu0
  %v1307 = vadd.f32 %v1178, %v1306
  %1308 = vmatmul.bf16.gmra.mxu0 %v433
  %v1309 = vpop.f32.mrf.mxu0
  %v1310 = vadd.f32 %v1181, %v1309
  %v1311 = vpop.f32.mrf.mxu0
  %v1312 = vadd.f32 %v1183, %v1311
  %1313 = vmatmul.bf16.gmra.mxu0 %v436
  %v1314 = vpop.f32.mrf.mxu0
  %v1315 = vadd.f32 %v1186, %v1314
  %v1316 = vpop.f32.mrf.mxu0
  %v1317 = vadd.f32 %v1188, %v1316
  %1318 = vmatmul.bf16.gmra.mxu0 %v439
  %v1319 = vpop.f32.mrf.mxu0
  %v1320 = vadd.f32 %v1191, %v1319
  %v1321 = vpop.f32.mrf.mxu0
  %v1322 = vadd.f32 %v1193, %v1321
  %1323 = vmatmul.bf16.gmra.mxu0 %v442
  %v1324 = vpop.f32.mrf.mxu0
  %v1325 = vadd.f32 %v1196, %v1324
  %v1326 = vpop.f32.mrf.mxu0
  %v1327 = vadd.f32 %v1198, %v1326
  %1328 = vmatmul.bf16.gmra.mxu0 %v445
  %v1329 = vpop.f32.mrf.mxu0
  %v1330 = vadd.f32 %v1201, %v1329
  %v1331 = vpop.f32.mrf.mxu0
  %v1332 = vadd.f32 %v1203, %v1331
  %1333 = vmatmul.bf16.gmra.mxu0 %v448
  %v1334 = vpop.f32.mrf.mxu0
  %v1335 = vadd.f32 %v1206, %v1334
  %v1336 = vpop.f32.mrf.mxu0
  %v1337 = vadd.f32 %v1208, %v1336
  %1338 = vmatmul.bf16.gmra.mxu0 %v451
  %v1339 = vpop.f32.mrf.mxu0
  %v1340 = vadd.f32 %v1211, %v1339
  %v1341 = vpop.f32.mrf.mxu0
  %v1342 = vadd.f32 %v1213, %v1341
  %1343 = vmatmul.bf16.gmra.mxu0 %v454
  %v1344 = vpop.f32.mrf.mxu0
  %v1345 = vadd.f32 %v1216, %v1344
  %v1346 = vpop.f32.mrf.mxu0
  %v1347 = vadd.f32 %v1218, %v1346
  %1348 = vmatmul.bf16.gmra.mxu0 %v457
  %v1349 = vpop.f32.mrf.mxu0
  %v1350 = vadd.f32 %v1221, %v1349
  %v1351 = vpop.f32.mrf.mxu0
  %v1352 = vadd.f32 %v1223, %v1351
  %1353 = vmatmul.bf16.gmra.mxu0 %v460
  %v1354 = vpop.f32.mrf.mxu0
  %v1355 = vadd.f32 %v1226, %v1354
  %v1356 = vpop.f32.mrf.mxu0
  %v1357 = vadd.f32 %v1228, %v1356
  %1358 = vmatmul.bf16.gmra.mxu0 %v463
  %v1359 = vpop.f32.mrf.mxu0
  %v1360 = vadd.f32 %v1231, %v1359
  %v1361 = vpop.f32.mrf.mxu0
  %v1362 = vadd.f32 %v1233, %v1361
  %1363 = vmatmul.bf16.gmra.mxu0 %v466
  %v1364 = vpop.f32.mrf.mxu0
  %v1365 = vadd.f32 %v1236, %v1364
  %v1366 = vpop.f32.mrf.mxu0
  %v1367 = vadd.f32 %v1238, %v1366
  %1368 = vmatmul.bf16.gmra.mxu0 %v469
  %v1369 = vpop.f32.mrf.mxu0
  %v1370 = vadd.f32 %v1241, %v1369
  %v1371 = vpop.f32.mrf.mxu0
  %v1372 = vadd.f32 %v1243, %v1371
  %1373 = vmatmul.bf16.gmra.mxu0 %v472
  %v1374 = vpop.f32.mrf.mxu0
  %v1375 = vadd.f32 %v1246, %v1374
  %v1376 = vpop.f32.mrf.mxu0
  %v1377 = vadd.f32 %v1248, %v1376
  %1378 = vmatmul.bf16.gmra.mxu0 %v475
  %v1379 = vpop.f32.mrf.mxu0
  %v1380 = vadd.f32 %v1251, %v1379
  %v1381 = vpop.f32.mrf.mxu0
  %v1382 = vadd.f32 %v1253, %v1381
  %1383 = vmatmul.bf16.gmra.mxu0 %v478
  %v1384 = vpop.f32.mrf.mxu0
  %v1385 = vadd.f32 %v1256, %v1384
  %v1386 = vpop.f32.mrf.mxu0
  %v1387 = vadd.f32 %v1258, %v1386
  %1388 = vmatmul.bf16.gmra.mxu0 %v481
  %v1389 = vpop.f32.mrf.mxu0
  %v1390 = vadd.f32 %v1261, %v1389
  %v1391 = vpop.f32.mrf.mxu0
  %v1392 = vadd.f32 %v1263, %v1391
  %1393 = vmatmul.bf16.gmra.mxu0 %v484
  %v1394 = vpop.f32.mrf.mxu0
  %v1395 = vadd.f32 %v1266, %v1394
  %v1396 = vpop.f32.mrf.mxu0
  %v1397 = vadd.f32 %v1268, %v1396
  %1398 = vmatmul.bf16.gmra.mxu0 %v487
  %v1399 = vpop.f32.mrf.mxu0
  %v1400 = vadd.f32 %v1271, %v1399
  %v1401 = vpop.f32.mrf.mxu0
  %v1402 = vadd.f32 %v1273, %v1401
  %1403 = vmatmul.bf16.gmra.mxu0 %v490
  %v1404 = vpop.f32.mrf.mxu0
  %v1405 = vadd.f32 %v1276, %v1404
  %v1406 = vpop.f32.mrf.mxu0
  %v1407 = vadd.f32 %v1278, %v1406
  %1408 = vdwg.mxu0
  %v1409 = vadd.f32 %v950, %v1290
  %v1410 = vadd.f32 %v951, %v1292
  %v1411 = vadd.f32 %v952, %v1295
  %v1412 = vadd.f32 %v953, %v1297
  %v1413 = vadd.f32 %v954, %v1300
  %v1414 = vadd.f32 %v955, %v1302
  %v1415 = vadd.f32 %v956, %v1305
  %v1416 = vadd.f32 %v957, %v1307
  %v1417 = vadd.f32 %v958, %v1310
  %v1418 = vadd.f32 %v959, %v1312
  %v1419 = vadd.f32 %v960, %v1315
  %v1420 = vadd.f32 %v961, %v1317
  %v1421 = vadd.f32 %v962, %v1320
  %v1422 = vadd.f32 %v963, %v1322
  %v1423 = vadd.f32 %v964, %v1325
  %v1424 = vadd.f32 %v965, %v1327
  %v1425 = vadd.f32 %v966, %v1330
  %v1426 = vadd.f32 %v967, %v1332
  %v1427 = vadd.f32 %v968, %v1335
  %v1428 = vadd.f32 %v969, %v1337
  %v1429 = vadd.f32 %v970, %v1340
  %v1430 = vadd.f32 %v971, %v1342
  %v1431 = vadd.f32 %v972, %v1345
  %v1432 = vadd.f32 %v973, %v1347
  %v1433 = vadd.f32 %v974, %v1350
  %v1434 = vadd.f32 %v975, %v1352
  %v1435 = vadd.f32 %v976, %v1355
  %v1436 = vadd.f32 %v977, %v1357
  %v1437 = vadd.f32 %v978, %v1360
  %v1438 = vadd.f32 %v979, %v1362
  %v1439 = vadd.f32 %v980, %v1365
  %v1440 = vadd.f32 %v981, %v1367
  %v1441 = vadd.f32 %v982, %v1370
  %v1442 = vadd.f32 %v983, %v1372
  %v1443 = vadd.f32 %v984, %v1375
  %v1444 = vadd.f32 %v985, %v1377
  %v1445 = vadd.f32 %v986, %v1380
  %v1446 = vadd.f32 %v987, %v1382
  %v1447 = vadd.f32 %v988, %v1385
  %v1448 = vadd.f32 %v989, %v1387
  %v1449 = vadd.f32 %v990, %v1390
  %v1450 = vadd.f32 %v991, %v1392
  %v1451 = vadd.f32 %v992, %v1395
  %v1452 = vadd.f32 %v993, %v1397
  %v1453 = vadd.f32 %v994, %v1400
  %v1454 = vadd.f32 %v995, %v1402
  %v1455 = vadd.f32 %v996, %v1405
  %v1456 = vadd.f32 %v997, %v1407
  %v1457 = vpack.c.bf16 %v1292, %v1290
  %v1458 = vpack.c.bf16 %v1297, %v1295
  %v1459 = vpack.c.bf16 %v1302, %v1300
  %v1460 = vpack.c.bf16 %v1307, %v1305
  %v1461 = vpack.c.bf16 %v1312, %v1310
  %v1462 = vpack.c.bf16 %v1317, %v1315
  %v1463 = vpack.c.bf16 %v1322, %v1320
  %v1464 = vpack.c.bf16 %v1327, %v1325
  %v1465 = vpack.c.bf16 %v1332, %v1330
  %v1466 = vpack.c.bf16 %v1337, %v1335
  %v1467 = vpack.c.bf16 %v1342, %v1340
  %v1468 = vpack.c.bf16 %v1347, %v1345
  %v1469 = vpack.c.bf16 %v1352, %v1350
  %v1470 = vpack.c.bf16 %v1357, %v1355
  %v1471 = vpack.c.bf16 %v1362, %v1360
  %v1472 = vpack.c.bf16 %v1367, %v1365
  %v1473 = vpack.c.bf16 %v1372, %v1370
  %v1474 = vpack.c.bf16 %v1377, %v1375
  %v1475 = vpack.c.bf16 %v1382, %v1380
  %v1476 = vpack.c.bf16 %v1387, %v1385
  %v1477 = vpack.c.bf16 %v1392, %v1390
  %v1478 = vpack.c.bf16 %v1397, %v1395
  %v1479 = vpack.c.bf16 %v1402, %v1400
  %v1480 = vpack.c.bf16 %v1407, %v1405
  %1481 = vmatpush.bf16.msra.mxu0 %v1464
  %1482 = vmatpush.bf16.msra.mxu0 %v1463
  %1483 = vmatpush.bf16.msra.mxu0 %v1462
  %1484 = vmatpush.bf16.msra.mxu0 %v1461
  %1485 = vmatpush.bf16.msra.mxu0 %v1460
  %1486 = vmatpush.bf16.msra.mxu0 %v1459
  %1487 = vmatpush.bf16.msra.mxu0 %v1458
  %1488 = vmatpush.bf16.msra.mxu0 %v1457
  %1489 = vmatmul.bf16.gmra.mxu0 %v419
  %v1490 = vpop.f32.mrf.mxu0
  %v1491 = vadd.f32 0.0, %v1490
  %v1492 = vpop.f32.mrf.mxu0
  %v1493 = vadd.f32 0.0, %v1492
  %1494 = vmatmul.bf16.gmra.mxu0 %v422
  %v1495 = vpop.f32.mrf.mxu0
  %v1496 = vadd.f32 0.0, %v1495
  %v1497 = vpop.f32.mrf.mxu0
  %v1498 = vadd.f32 0.0, %v1497
  %1499 = vmatmul.bf16.gmra.mxu0 %v425
  %v1500 = vpop.f32.mrf.mxu0
  %v1501 = vadd.f32 0.0, %v1500
  %v1502 = vpop.f32.mrf.mxu0
  %v1503 = vadd.f32 0.0, %v1502
  %1504 = vmatmul.bf16.gmra.mxu0 %v428
  %v1505 = vpop.f32.mrf.mxu0
  %v1506 = vadd.f32 0.0, %v1505
  %v1507 = vpop.f32.mrf.mxu0
  %v1508 = vadd.f32 0.0, %v1507
  %1509 = vmatmul.bf16.gmra.mxu0 %v431
  %v1510 = vpop.f32.mrf.mxu0
  %v1511 = vadd.f32 0.0, %v1510
  %v1512 = vpop.f32.mrf.mxu0
  %v1513 = vadd.f32 0.0, %v1512
  %1514 = vmatmul.bf16.gmra.mxu0 %v434
  %v1515 = vpop.f32.mrf.mxu0
  %v1516 = vadd.f32 0.0, %v1515
  %v1517 = vpop.f32.mrf.mxu0
  %v1518 = vadd.f32 0.0, %v1517
  %1519 = vmatmul.bf16.gmra.mxu0 %v437
  %v1520 = vpop.f32.mrf.mxu0
  %v1521 = vadd.f32 0.0, %v1520
  %v1522 = vpop.f32.mrf.mxu0
  %v1523 = vadd.f32 0.0, %v1522
  %1524 = vmatmul.bf16.gmra.mxu0 %v440
  %v1525 = vpop.f32.mrf.mxu0
  %v1526 = vadd.f32 0.0, %v1525
  %v1527 = vpop.f32.mrf.mxu0
  %v1528 = vadd.f32 0.0, %v1527
  %1529 = vmatmul.bf16.gmra.mxu0 %v443
  %v1530 = vpop.f32.mrf.mxu0
  %v1531 = vadd.f32 0.0, %v1530
  %v1532 = vpop.f32.mrf.mxu0
  %v1533 = vadd.f32 0.0, %v1532
  %1534 = vmatmul.bf16.gmra.mxu0 %v446
  %v1535 = vpop.f32.mrf.mxu0
  %v1536 = vadd.f32 0.0, %v1535
  %v1537 = vpop.f32.mrf.mxu0
  %v1538 = vadd.f32 0.0, %v1537
  %1539 = vmatmul.bf16.gmra.mxu0 %v449
  %v1540 = vpop.f32.mrf.mxu0
  %v1541 = vadd.f32 0.0, %v1540
  %v1542 = vpop.f32.mrf.mxu0
  %v1543 = vadd.f32 0.0, %v1542
  %1544 = vmatmul.bf16.gmra.mxu0 %v452
  %v1545 = vpop.f32.mrf.mxu0
  %v1546 = vadd.f32 0.0, %v1545
  %v1547 = vpop.f32.mrf.mxu0
  %v1548 = vadd.f32 0.0, %v1547
  %1549 = vmatmul.bf16.gmra.mxu0 %v455
  %v1550 = vpop.f32.mrf.mxu0
  %v1551 = vadd.f32 0.0, %v1550
  %v1552 = vpop.f32.mrf.mxu0
  %v1553 = vadd.f32 0.0, %v1552
  %1554 = vmatmul.bf16.gmra.mxu0 %v458
  %v1555 = vpop.f32.mrf.mxu0
  %v1556 = vadd.f32 0.0, %v1555
  %v1557 = vpop.f32.mrf.mxu0
  %v1558 = vadd.f32 0.0, %v1557
  %1559 = vmatmul.bf16.gmra.mxu0 %v461
  %v1560 = vpop.f32.mrf.mxu0
  %v1561 = vadd.f32 0.0, %v1560
  %v1562 = vpop.f32.mrf.mxu0
  %v1563 = vadd.f32 0.0, %v1562
  %1564 = vmatmul.bf16.gmra.mxu0 %v464
  %v1565 = vpop.f32.mrf.mxu0
  %v1566 = vadd.f32 0.0, %v1565
  %v1567 = vpop.f32.mrf.mxu0
  %v1568 = vadd.f32 0.0, %v1567
  %1569 = vmatmul.bf16.gmra.mxu0 %v467
  %v1570 = vpop.f32.mrf.mxu0
  %v1571 = vadd.f32 0.0, %v1570
  %v1572 = vpop.f32.mrf.mxu0
  %v1573 = vadd.f32 0.0, %v1572
  %1574 = vmatmul.bf16.gmra.mxu0 %v470
  %v1575 = vpop.f32.mrf.mxu0
  %v1576 = vadd.f32 0.0, %v1575
  %v1577 = vpop.f32.mrf.mxu0
  %v1578 = vadd.f32 0.0, %v1577
  %1579 = vmatmul.bf16.gmra.mxu0 %v473
  %v1580 = vpop.f32.mrf.mxu0
  %v1581 = vadd.f32 0.0, %v1580
  %v1582 = vpop.f32.mrf.mxu0
  %v1583 = vadd.f32 0.0, %v1582
  %1584 = vmatmul.bf16.gmra.mxu0 %v476
  %v1585 = vpop.f32.mrf.mxu0
  %v1586 = vadd.f32 0.0, %v1585
  %v1587 = vpop.f32.mrf.mxu0
  %v1588 = vadd.f32 0.0, %v1587
  %1589 = vmatmul.bf16.gmra.mxu0 %v479
  %v1590 = vpop.f32.mrf.mxu0
  %v1591 = vadd.f32 0.0, %v1590
  %v1592 = vpop.f32.mrf.mxu0
  %v1593 = vadd.f32 0.0, %v1592
  %1594 = vmatmul.bf16.gmra.mxu0 %v482
  %v1595 = vpop.f32.mrf.mxu0
  %v1596 = vadd.f32 0.0, %v1595
  %v1597 = vpop.f32.mrf.mxu0
  %v1598 = vadd.f32 0.0, %v1597
  %1599 = vmatmul.bf16.gmra.mxu0 %v485
  %v1600 = vpop.f32.mrf.mxu0
  %v1601 = vadd.f32 0.0, %v1600
  %v1602 = vpop.f32.mrf.mxu0
  %v1603 = vadd.f32 0.0, %v1602
  %1604 = vmatmul.bf16.gmra.mxu0 %v488
  %v1605 = vpop.f32.mrf.mxu0
  %v1606 = vadd.f32 0.0, %v1605
  %v1607 = vpop.f32.mrf.mxu0
  %v1608 = vadd.f32 0.0, %v1607
  %1609 = vdwg.mxu0
  %1610 = vmatpush.bf16.msra.mxu0 %v1472
  %1611 = vmatpush.bf16.msra.mxu0 %v1471
  %1612 = vmatpush.bf16.msra.mxu0 %v1470
  %1613 = vmatpush.bf16.msra.mxu0 %v1469
  %1614 = vmatpush.bf16.msra.mxu0 %v1468
  %1615 = vmatpush.bf16.msra.mxu0 %v1467
  %1616 = vmatpush.bf16.msra.mxu0 %v1466
  %1617 = vmatpush.bf16.msra.mxu0 %v1465
  %1618 = vmatmul.bf16.gmra.mxu0 %v420
  %v1619 = vpop.f32.mrf.mxu0
  %v1620 = vadd.f32 %v1491, %v1619
  %v1621 = vpop.f32.mrf.mxu0
  %v1622 = vadd.f32 %v1493, %v1621
  %1623 = vmatmul.bf16.gmra.mxu0 %v423
  %v1624 = vpop.f32.mrf.mxu0
  %v1625 = vadd.f32 %v1496, %v1624
  %v1626 = vpop.f32.mrf.mxu0
  %v1627 = vadd.f32 %v1498, %v1626
  %1628 = vmatmul.bf16.gmra.mxu0 %v426
  %v1629 = vpop.f32.mrf.mxu0
  %v1630 = vadd.f32 %v1501, %v1629
  %v1631 = vpop.f32.mrf.mxu0
  %v1632 = vadd.f32 %v1503, %v1631
  %1633 = vmatmul.bf16.gmra.mxu0 %v429
  %v1634 = vpop.f32.mrf.mxu0
  %v1635 = vadd.f32 %v1506, %v1634
  %v1636 = vpop.f32.mrf.mxu0
  %v1637 = vadd.f32 %v1508, %v1636
  %1638 = vmatmul.bf16.gmra.mxu0 %v432
  %v1639 = vpop.f32.mrf.mxu0
  %v1640 = vadd.f32 %v1511, %v1639
  %v1641 = vpop.f32.mrf.mxu0
  %v1642 = vadd.f32 %v1513, %v1641
  %1643 = vmatmul.bf16.gmra.mxu0 %v435
  %v1644 = vpop.f32.mrf.mxu0
  %v1645 = vadd.f32 %v1516, %v1644
  %v1646 = vpop.f32.mrf.mxu0
  %v1647 = vadd.f32 %v1518, %v1646
  %1648 = vmatmul.bf16.gmra.mxu0 %v438
  %v1649 = vpop.f32.mrf.mxu0
  %v1650 = vadd.f32 %v1521, %v1649
  %v1651 = vpop.f32.mrf.mxu0
  %v1652 = vadd.f32 %v1523, %v1651
  %1653 = vmatmul.bf16.gmra.mxu0 %v441
  %v1654 = vpop.f32.mrf.mxu0
  %v1655 = vadd.f32 %v1526, %v1654
  %v1656 = vpop.f32.mrf.mxu0
  %v1657 = vadd.f32 %v1528, %v1656
  %1658 = vmatmul.bf16.gmra.mxu0 %v444
  %v1659 = vpop.f32.mrf.mxu0
  %v1660 = vadd.f32 %v1531, %v1659
  %v1661 = vpop.f32.mrf.mxu0
  %v1662 = vadd.f32 %v1533, %v1661
  %1663 = vmatmul.bf16.gmra.mxu0 %v447
  %v1664 = vpop.f32.mrf.mxu0
  %v1665 = vadd.f32 %v1536, %v1664
  %v1666 = vpop.f32.mrf.mxu0
  %v1667 = vadd.f32 %v1538, %v1666
  %1668 = vmatmul.bf16.gmra.mxu0 %v450
  %v1669 = vpop.f32.mrf.mxu0
  %v1670 = vadd.f32 %v1541, %v1669
  %v1671 = vpop.f32.mrf.mxu0
  %v1672 = vadd.f32 %v1543, %v1671
  %1673 = vmatmul.bf16.gmra.mxu0 %v453
  %v1674 = vpop.f32.mrf.mxu0
  %v1675 = vadd.f32 %v1546, %v1674
  %v1676 = vpop.f32.mrf.mxu0
  %v1677 = vadd.f32 %v1548, %v1676
  %1678 = vmatmul.bf16.gmra.mxu0 %v456
  %v1679 = vpop.f32.mrf.mxu0
  %v1680 = vadd.f32 %v1551, %v1679
  %v1681 = vpop.f32.mrf.mxu0
  %v1682 = vadd.f32 %v1553, %v1681
  %1683 = vmatmul.bf16.gmra.mxu0 %v459
  %v1684 = vpop.f32.mrf.mxu0
  %v1685 = vadd.f32 %v1556, %v1684
  %v1686 = vpop.f32.mrf.mxu0
  %v1687 = vadd.f32 %v1558, %v1686
  %1688 = vmatmul.bf16.gmra.mxu0 %v462
  %v1689 = vpop.f32.mrf.mxu0
  %v1690 = vadd.f32 %v1561, %v1689
  %v1691 = vpop.f32.mrf.mxu0
  %v1692 = vadd.f32 %v1563, %v1691
  %1693 = vmatmul.bf16.gmra.mxu0 %v465
  %v1694 = vpop.f32.mrf.mxu0
  %v1695 = vadd.f32 %v1566, %v1694
  %v1696 = vpop.f32.mrf.mxu0
  %v1697 = vadd.f32 %v1568, %v1696
  %1698 = vmatmul.bf16.gmra.mxu0 %v468
  %v1699 = vpop.f32.mrf.mxu0
  %v1700 = vadd.f32 %v1571, %v1699
  %v1701 = vpop.f32.mrf.mxu0
  %v1702 = vadd.f32 %v1573, %v1701
  %1703 = vmatmul.bf16.gmra.mxu0 %v471
  %v1704 = vpop.f32.mrf.mxu0
  %v1705 = vadd.f32 %v1576, %v1704
  %v1706 = vpop.f32.mrf.mxu0
  %v1707 = vadd.f32 %v1578, %v1706
  %1708 = vmatmul.bf16.gmra.mxu0 %v474
  %v1709 = vpop.f32.mrf.mxu0
  %v1710 = vadd.f32 %v1581, %v1709
  %v1711 = vpop.f32.mrf.mxu0
  %v1712 = vadd.f32 %v1583, %v1711
  %1713 = vmatmul.bf16.gmra.mxu0 %v477
  %v1714 = vpop.f32.mrf.mxu0
  %v1715 = vadd.f32 %v1586, %v1714
  %v1716 = vpop.f32.mrf.mxu0
  %v1717 = vadd.f32 %v1588, %v1716
  %1718 = vmatmul.bf16.gmra.mxu0 %v480
  %v1719 = vpop.f32.mrf.mxu0
  %v1720 = vadd.f32 %v1591, %v1719
  %v1721 = vpop.f32.mrf.mxu0
  %v1722 = vadd.f32 %v1593, %v1721
  %1723 = vmatmul.bf16.gmra.mxu0 %v483
  %v1724 = vpop.f32.mrf.mxu0
  %v1725 = vadd.f32 %v1596, %v1724
  %v1726 = vpop.f32.mrf.mxu0
  %v1727 = vadd.f32 %v1598, %v1726
  %1728 = vmatmul.bf16.gmra.mxu0 %v486
  %v1729 = vpop.f32.mrf.mxu0
  %v1730 = vadd.f32 %v1601, %v1729
  %v1731 = vpop.f32.mrf.mxu0
  %v1732 = vadd.f32 %v1603, %v1731
  %1733 = vmatmul.bf16.gmra.mxu0 %v489
  %v1734 = vpop.f32.mrf.mxu0
  %v1735 = vadd.f32 %v1606, %v1734
  %v1736 = vpop.f32.mrf.mxu0
  %v1737 = vadd.f32 %v1608, %v1736
  %1738 = vdwg.mxu0
  %1739 = vmatpush.bf16.msra.mxu0 %v1480
  %1740 = vmatpush.bf16.msra.mxu0 %v1479
  %1741 = vmatpush.bf16.msra.mxu0 %v1478
  %1742 = vmatpush.bf16.msra.mxu0 %v1477
  %1743 = vmatpush.bf16.msra.mxu0 %v1476
  %1744 = vmatpush.bf16.msra.mxu0 %v1475
  %1745 = vmatpush.bf16.msra.mxu0 %v1474
  %1746 = vmatpush.bf16.msra.mxu0 %v1473
  %1747 = vmatmul.bf16.gmra.mxu0 %v421
  %v1748 = vpop.f32.mrf.mxu0
  %v1749 = vadd.f32 %v1620, %v1748
  %v1750 = vpop.f32.mrf.mxu0
  %v1751 = vadd.f32 %v1622, %v1750
  %1752 = vmatmul.bf16.gmra.mxu0 %v424
  %v1753 = vpop.f32.mrf.mxu0
  %v1754 = vadd.f32 %v1625, %v1753
  %v1755 = vpop.f32.mrf.mxu0
  %v1756 = vadd.f32 %v1627, %v1755
  %1757 = vmatmul.bf16.gmra.mxu0 %v427
  %v1758 = vpop.f32.mrf.mxu0
  %v1759 = vadd.f32 %v1630, %v1758
  %v1760 = vpop.f32.mrf.mxu0
  %v1761 = vadd.f32 %v1632, %v1760
  %1762 = vmatmul.bf16.gmra.mxu0 %v430
  %v1763 = vpop.f32.mrf.mxu0
  %v1764 = vadd.f32 %v1635, %v1763
  %v1765 = vpop.f32.mrf.mxu0
  %v1766 = vadd.f32 %v1637, %v1765
  %1767 = vmatmul.bf16.gmra.mxu0 %v433
  %v1768 = vpop.f32.mrf.mxu0
  %v1769 = vadd.f32 %v1640, %v1768
  %v1770 = vpop.f32.mrf.mxu0
  %v1771 = vadd.f32 %v1642, %v1770
  %1772 = vmatmul.bf16.gmra.mxu0 %v436
  %v1773 = vpop.f32.mrf.mxu0
  %v1774 = vadd.f32 %v1645, %v1773
  %v1775 = vpop.f32.mrf.mxu0
  %v1776 = vadd.f32 %v1647, %v1775
  %1777 = vmatmul.bf16.gmra.mxu0 %v439
  %v1778 = vpop.f32.mrf.mxu0
  %v1779 = vadd.f32 %v1650, %v1778
  %v1780 = vpop.f32.mrf.mxu0
  %v1781 = vadd.f32 %v1652, %v1780
  %1782 = vmatmul.bf16.gmra.mxu0 %v442
  %v1783 = vpop.f32.mrf.mxu0
  %v1784 = vadd.f32 %v1655, %v1783
  %v1785 = vpop.f32.mrf.mxu0
  %v1786 = vadd.f32 %v1657, %v1785
  %1787 = vmatmul.bf16.gmra.mxu0 %v445
  %v1788 = vpop.f32.mrf.mxu0
  %v1789 = vadd.f32 %v1660, %v1788
  %v1790 = vpop.f32.mrf.mxu0
  %v1791 = vadd.f32 %v1662, %v1790
  %1792 = vmatmul.bf16.gmra.mxu0 %v448
  %v1793 = vpop.f32.mrf.mxu0
  %v1794 = vadd.f32 %v1665, %v1793
  %v1795 = vpop.f32.mrf.mxu0
  %v1796 = vadd.f32 %v1667, %v1795
  %1797 = vmatmul.bf16.gmra.mxu0 %v451
  %v1798 = vpop.f32.mrf.mxu0
  %v1799 = vadd.f32 %v1670, %v1798
  %v1800 = vpop.f32.mrf.mxu0
  %v1801 = vadd.f32 %v1672, %v1800
  %1802 = vmatmul.bf16.gmra.mxu0 %v454
  %v1803 = vpop.f32.mrf.mxu0
  %v1804 = vadd.f32 %v1675, %v1803
  %v1805 = vpop.f32.mrf.mxu0
  %v1806 = vadd.f32 %v1677, %v1805
  %1807 = vmatmul.bf16.gmra.mxu0 %v457
  %v1808 = vpop.f32.mrf.mxu0
  %v1809 = vadd.f32 %v1680, %v1808
  %v1810 = vpop.f32.mrf.mxu0
  %v1811 = vadd.f32 %v1682, %v1810
  %1812 = vmatmul.bf16.gmra.mxu0 %v460
  %v1813 = vpop.f32.mrf.mxu0
  %v1814 = vadd.f32 %v1685, %v1813
  %v1815 = vpop.f32.mrf.mxu0
  %v1816 = vadd.f32 %v1687, %v1815
  %1817 = vmatmul.bf16.gmra.mxu0 %v463
  %v1818 = vpop.f32.mrf.mxu0
  %v1819 = vadd.f32 %v1690, %v1818
  %v1820 = vpop.f32.mrf.mxu0
  %v1821 = vadd.f32 %v1692, %v1820
  %1822 = vmatmul.bf16.gmra.mxu0 %v466
  %v1823 = vpop.f32.mrf.mxu0
  %v1824 = vadd.f32 %v1695, %v1823
  %v1825 = vpop.f32.mrf.mxu0
  %v1826 = vadd.f32 %v1697, %v1825
  %1827 = vmatmul.bf16.gmra.mxu0 %v469
  %v1828 = vpop.f32.mrf.mxu0
  %v1829 = vadd.f32 %v1700, %v1828
  %v1830 = vpop.f32.mrf.mxu0
  %v1831 = vadd.f32 %v1702, %v1830
  %1832 = vmatmul.bf16.gmra.mxu0 %v472
  %v1833 = vpop.f32.mrf.mxu0
  %v1834 = vadd.f32 %v1705, %v1833
  %v1835 = vpop.f32.mrf.mxu0
  %v1836 = vadd.f32 %v1707, %v1835
  %1837 = vmatmul.bf16.gmra.mxu0 %v475
  %v1838 = vpop.f32.mrf.mxu0
  %v1839 = vadd.f32 %v1710, %v1838
  %v1840 = vpop.f32.mrf.mxu0
  %v1841 = vadd.f32 %v1712, %v1840
  %1842 = vmatmul.bf16.gmra.mxu0 %v478
  %v1843 = vpop.f32.mrf.mxu0
  %v1844 = vadd.f32 %v1715, %v1843
  %v1845 = vpop.f32.mrf.mxu0
  %v1846 = vadd.f32 %v1717, %v1845
  %1847 = vmatmul.bf16.gmra.mxu0 %v481
  %v1848 = vpop.f32.mrf.mxu0
  %v1849 = vadd.f32 %v1720, %v1848
  %v1850 = vpop.f32.mrf.mxu0
  %v1851 = vadd.f32 %v1722, %v1850
  %1852 = vmatmul.bf16.gmra.mxu0 %v484
  %v1853 = vpop.f32.mrf.mxu0
  %v1854 = vadd.f32 %v1725, %v1853
  %v1855 = vpop.f32.mrf.mxu0
  %v1856 = vadd.f32 %v1727, %v1855
  %1857 = vmatmul.bf16.gmra.mxu0 %v487
  %v1858 = vpop.f32.mrf.mxu0
  %v1859 = vadd.f32 %v1730, %v1858
  %v1860 = vpop.f32.mrf.mxu0
  %v1861 = vadd.f32 %v1732, %v1860
  %1862 = vmatmul.bf16.gmra.mxu0 %v490
  %v1863 = vpop.f32.mrf.mxu0
  %v1864 = vadd.f32 %v1735, %v1863
  %v1865 = vpop.f32.mrf.mxu0
  %v1866 = vadd.f32 %v1737, %v1865
  %1867 = vdwg.mxu0
  %v1868 = vadd.f32 %v1409, %v1749
  %v1869 = vadd.f32 %v1410, %v1751
  %v1870 = vadd.f32 %v1411, %v1754
  %v1871 = vadd.f32 %v1412, %v1756
  %v1872 = vadd.f32 %v1413, %v1759
  %v1873 = vadd.f32 %v1414, %v1761
  %v1874 = vadd.f32 %v1415, %v1764
  %v1875 = vadd.f32 %v1416, %v1766
  %v1876 = vadd.f32 %v1417, %v1769
  %v1877 = vadd.f32 %v1418, %v1771
  %v1878 = vadd.f32 %v1419, %v1774
  %v1879 = vadd.f32 %v1420, %v1776
  %v1880 = vadd.f32 %v1421, %v1779
  %v1881 = vadd.f32 %v1422, %v1781
  %v1882 = vadd.f32 %v1423, %v1784
  %v1883 = vadd.f32 %v1424, %v1786
  %v1884 = vadd.f32 %v1425, %v1789
  %v1885 = vadd.f32 %v1426, %v1791
  %v1886 = vadd.f32 %v1427, %v1794
  %v1887 = vadd.f32 %v1428, %v1796
  %v1888 = vadd.f32 %v1429, %v1799
  %v1889 = vadd.f32 %v1430, %v1801
  %v1890 = vadd.f32 %v1431, %v1804
  %v1891 = vadd.f32 %v1432, %v1806
  %v1892 = vadd.f32 %v1433, %v1809
  %v1893 = vadd.f32 %v1434, %v1811
  %v1894 = vadd.f32 %v1435, %v1814
  %v1895 = vadd.f32 %v1436, %v1816
  %v1896 = vadd.f32 %v1437, %v1819
  %v1897 = vadd.f32 %v1438, %v1821
  %v1898 = vadd.f32 %v1439, %v1824
  %v1899 = vadd.f32 %v1440, %v1826
  %v1900 = vadd.f32 %v1441, %v1829
  %v1901 = vadd.f32 %v1442, %v1831
  %v1902 = vadd.f32 %v1443, %v1834
  %v1903 = vadd.f32 %v1444, %v1836
  %v1904 = vadd.f32 %v1445, %v1839
  %v1905 = vadd.f32 %v1446, %v1841
  %v1906 = vadd.f32 %v1447, %v1844
  %v1907 = vadd.f32 %v1448, %v1846
  %v1908 = vadd.f32 %v1449, %v1849
  %v1909 = vadd.f32 %v1450, %v1851
  %v1910 = vadd.f32 %v1451, %v1854
  %v1911 = vadd.f32 %v1452, %v1856
  %v1912 = vadd.f32 %v1453, %v1859
  %v1913 = vadd.f32 %v1454, %v1861
  %v1914 = vadd.f32 %v1455, %v1864
  %v1915 = vadd.f32 %v1456, %v1866
  %v1916 = vmul.f32 %v1868, 0.25
  %v1917 = vmul.f32 %v1869, 0.25
  %v1918 = vmul.f32 %v1870, 0.25
  %v1919 = vmul.f32 %v1871, 0.25
  %v1920 = vmul.f32 %v1872, 0.25
  %v1921 = vmul.f32 %v1873, 0.25
  %v1922 = vmul.f32 %v1874, 0.25
  %v1923 = vmul.f32 %v1875, 0.25
  %v1924 = vmul.f32 %v1876, 0.25
  %v1925 = vmul.f32 %v1877, 0.25
  %v1926 = vmul.f32 %v1878, 0.25
  %v1927 = vmul.f32 %v1879, 0.25
  %v1928 = vmul.f32 %v1880, 0.25
  %v1929 = vmul.f32 %v1881, 0.25
  %v1930 = vmul.f32 %v1882, 0.25
  %v1931 = vmul.f32 %v1883, 0.25
  %v1932 = vmul.f32 %v1884, 0.25
  %v1933 = vmul.f32 %v1885, 0.25
  %v1934 = vmul.f32 %v1886, 0.25
  %v1935 = vmul.f32 %v1887, 0.25
  %v1936 = vmul.f32 %v1888, 0.25
  %v1937 = vmul.f32 %v1889, 0.25
  %v1938 = vmul.f32 %v1890, 0.25
  %v1939 = vmul.f32 %v1891, 0.25
  %v1940 = vmul.f32 %v1892, 0.25
  %v1941 = vmul.f32 %v1893, 0.25
  %v1942 = vmul.f32 %v1894, 0.25
  %v1943 = vmul.f32 %v1895, 0.25
  %v1944 = vmul.f32 %v1896, 0.25
  %v1945 = vmul.f32 %v1897, 0.25
  %v1946 = vmul.f32 %v1898, 0.25
  %v1947 = vmul.f32 %v1899, 0.25
  %v1948 = vmul.f32 %v1900, 0.25
  %v1949 = vmul.f32 %v1901, 0.25
  %v1950 = vmul.f32 %v1902, 0.25
  %v1951 = vmul.f32 %v1903, 0.25
  %v1952 = vmul.f32 %v1904, 0.25
  %v1953 = vmul.f32 %v1905, 0.25
  %v1954 = vmul.f32 %v1906, 0.25
  %v1955 = vmul.f32 %v1907, 0.25
  %v1956 = vmul.f32 %v1908, 0.25
  %v1957 = vmul.f32 %v1909, 0.25
  %v1958 = vmul.f32 %v1910, 0.25
  %v1959 = vmul.f32 %v1911, 0.25
  %v1960 = vmul.f32 %v1912, 0.25
  %v1961 = vmul.f32 %v1913, 0.25
  %v1962 = vmul.f32 %v1914, 0.25
  %v1963 = vmul.f32 %v1915, 0.25
  %vm1964 = vcmask 261120
  %1965 = vst.msk [vmem:[%s2] sm:$0xff] %vm1964, %v1916
  %1966 = vst.msk [vmem:[%s2 + $0x8] sm:$0xff] %vm1964, %v1917
  %1967 = vst.msk [vmem:[%s2 + $0x10] sm:$0xff] %vm1964, %v1918
  %1968 = vst.msk [vmem:[%s2 + $0x18] sm:$0xff] %vm1964, %v1919
  %1969 = vst.msk [vmem:[%s2 + $0x20] sm:$0xff] %vm1964, %v1920
  %1970 = vst.msk [vmem:[%s2 + $0x28] sm:$0xff] %vm1964, %v1921
  %1971 = vst.msk [vmem:[%s2 + $0x30] sm:$0xff] %vm1964, %v1922
  %1972 = vst.msk [vmem:[%s2 + $0x38] sm:$0xff] %vm1964, %v1923
  %1973 = vst.msk [vmem:[%s2 + $0x40] sm:$0xff] %vm1964, %v1924
  %1974 = vst.msk [vmem:[%s2 + $0x48] sm:$0xff] %vm1964, %v1925
  %1975 = vst.msk [vmem:[%s2 + $0x50] sm:$0xff] %vm1964, %v1926
  %1976 = vst.msk [vmem:[%s2 + $0x58] sm:$0xff] %vm1964, %v1927
  %1977 = vst.msk [vmem:[%s2 + $0x60] sm:$0xff] %vm1964, %v1928
  %1978 = vst.msk [vmem:[%s2 + $0x68] sm:$0xff] %vm1964, %v1929
  %1979 = vst.msk [vmem:[%s2 + $0x70] sm:$0xff] %vm1964, %v1930
  %1980 = vst.msk [vmem:[%s2 + $0x78] sm:$0xff] %vm1964, %v1931
  %1981 = vst.msk [vmem:[%s2 + $0x80] sm:$0xff] %vm1964, %v1932
  %1982 = vst.msk [vmem:[%s2 + $0x88] sm:$0xff] %vm1964, %v1933
  %1983 = vst.msk [vmem:[%s2 + $0x90] sm:$0xff] %vm1964, %v1934
  %1984 = vst.msk [vmem:[%s2 + $0x98] sm:$0xff] %vm1964, %v1935
  %1985 = vst.msk [vmem:[%s2 + $0xa0] sm:$0xff] %vm1964, %v1936
  %1986 = vst.msk [vmem:[%s2 + $0xa8] sm:$0xff] %vm1964, %v1937
  %1987 = vst.msk [vmem:[%s2 + $0xb0] sm:$0xff] %vm1964, %v1938
  %1988 = vst.msk [vmem:[%s2 + $0xb8] sm:$0xff] %vm1964, %v1939
  %1989 = vst.msk [vmem:[%s2 + $0xc0] sm:$0xff] %vm1964, %v1940
  %1990 = vst.msk [vmem:[%s2 + $0xc8] sm:$0xff] %vm1964, %v1941
  %1991 = vst.msk [vmem:[%s2 + $0xd0] sm:$0xff] %vm1964, %v1942
  %1992 = vst.msk [vmem:[%s2 + $0xd8] sm:$0xff] %vm1964, %v1943
  %1993 = vst.msk [vmem:[%s2 + $0xe0] sm:$0xff] %vm1964, %v1944
  %1994 = vst.msk [vmem:[%s2 + $0xe8] sm:$0xff] %vm1964, %v1945
  %1995 = vst.msk [vmem:[%s2 + $0xf0] sm:$0xff] %vm1964, %v1946
  %1996 = vst.msk [vmem:[%s2 + $0xf8] sm:$0xff] %vm1964, %v1947
  %1997 = vst.msk [vmem:[%s2 + $0x100] sm:$0xff] %vm1964, %v1948
  %1998 = vst.msk [vmem:[%s2 + $0x108] sm:$0xff] %vm1964, %v1949
  %1999 = vst.msk [vmem:[%s2 + $0x110] sm:$0xff] %vm1964, %v1950
  %2000 = vst.msk [vmem:[%s2 + $0x118] sm:$0xff] %vm1964, %v1951
  %2001 = vst.msk [vmem:[%s2 + $0x120] sm:$0xff] %vm1964, %v1952
  %2002 = vst.msk [vmem:[%s2 + $0x128] sm:$0xff] %vm1964, %v1953
  %2003 = vst.msk [vmem:[%s2 + $0x130] sm:$0xff] %vm1964, %v1954
  %2004 = vst.msk [vmem:[%s2 + $0x138] sm:$0xff] %vm1964, %v1955
  %2005 = vst.msk [vmem:[%s2 + $0x140] sm:$0xff] %vm1964, %v1956
  %2006 = vst.msk [vmem:[%s2 + $0x148] sm:$0xff] %vm1964, %v1957
  %2007 = vst.msk [vmem:[%s2 + $0x150] sm:$0xff] %vm1964, %v1958
  %2008 = vst.msk [vmem:[%s2 + $0x158] sm:$0xff] %vm1964, %v1959
  %2009 = vst.msk [vmem:[%s2 + $0x160] sm:$0xff] %vm1964, %v1960
  %2010 = vst.msk [vmem:[%s2 + $0x168] sm:$0xff] %vm1964, %v1961
  %2011 = vst.msk [vmem:[%s2 + $0x170] sm:$0xff] %vm1964, %v1962
  %2012 = vst.msk [vmem:[%s2 + $0x178] sm:$0xff] %vm1964, %v1963
  // Predicated region
  $region10: #{lightgcn_forward.1} parent=0 // pred_check
    _
  $region11: #{lightgcn_forward.1} parent=0 // pred_check_branch
    %2014 = sbr.rel (0) target = $region13
  $region12: #{lightgcn_forward.1} parent=0 // pred_region
    _
  $region13: #{lightgcn_forward.1} parent=0 // pred_fallthru
    _
  // Predicated region
  $region14: #{lightgcn_forward.1} parent=0 // pred_check
    _
  $region15: #{lightgcn_forward.1} parent=0 // pred_check_branch
    %2016 = sbr.rel (0) target = $region17
  $region16: #{lightgcn_forward.1} parent=0 // pred_region
    _
  $region17: #{lightgcn_forward.1} parent=0 // pred_fallthru
    _

</llo_original>
